<compile_context>
chip_gen: v7x
topology: tpu7x:2x2x1
jax: 0.10.0
libtpu: 0.0.40
codegen_flags: <defaults>
</compile_context>

<pallas_src>
import math
import functools

import numpy as np
import jax
import jax.numpy as jnp
from jax.experimental import pallas as pl
from jax.experimental.pallas import tpu as pltpu


# -----------------------------------------------------------------------------
# Kernel: one EventerLayer forward for a tile of b_tile batch elements.
# -----------------------------------------------------------------------------
def _eventer_layer_kernel(H, dk, D, approx_recip, mm_dtype,
                          x_ref, mask_ref,
                          alpha_ref, beta_ref,
                          wq_ref, bq_ref, wkv_ref, bkv_ref,
                          wo_ref, bo_ref,
                          out_ref):
    Bt, T, _ = x_ref.shape
    S = T                           # self-attention: keys/values come from x
    M = Bt * T
    G = Bt * H

    x = x_ref[...]                  # (Bt, T, D), f32
    x_flat = x.reshape(M, D)

    # ---- Norm (PyTorch-faithful: unbiased std, eps added to the std), f32 ----
    mean = jnp.mean(x_flat, axis=-1, keepdims=True)
    ctr = x_flat - mean
    var = jnp.sum(ctr * ctr, axis=-1, keepdims=True) * (1.0 / (D - 1))
    inv_std = pl.reciprocal(jnp.sqrt(var) + 1e-6, approx=False)
    x2_flat = alpha_ref[...] * ctr * inv_std + beta_ref[...]

    # Matmul operands (bf16 on the fast path, f32 accumulation everywhere).
    x_mm = x_flat.astype(mm_dtype)
    x2_mm = x2_flat.astype(mm_dtype)

    # ---- Fused projections: Q from normalized x2, K/V from the raw x ----
    # (1/sqrt(dk) is already folded into wq/bq by the wrapper.)
    q = jnp.dot(x2_mm, wq_ref[...],
                preferred_element_type=jnp.float32) + bq_ref[...]       # (M, D)
    kv = jnp.dot(x_mm, wkv_ref[...],
                 preferred_element_type=jnp.float32) + bkv_ref[...]     # (M, 2D)
    k = kv[:, :D]
    v = kv[:, D:]

    # ---- Split heads: (M, H*dk) -> (Bt, H, T, dk) -> (G, T, dk) ----
    q_g = q.reshape(Bt, T, H, dk).transpose(0, 2, 1, 3).reshape(G, T, dk)
    k_g = k.reshape(Bt, S, H, dk).transpose(0, 2, 1, 3).reshape(G, S, dk)
    v_g = v.reshape(Bt, S, H, dk).transpose(0, 2, 1, 3).reshape(G, S, dk)

    # ---- Batched attention scores (scale already folded into q) ----
    s = jnp.einsum('gtd,gsd->gts',
                   q_g.astype(mm_dtype), k_g.astype(mm_dtype),
                   preferred_element_type=jnp.float32)                  # (G, T, S)

    # Mask: broadcast (Bt, 1, Tm, S) over heads against (Bt, H, T, S) view.
    s4 = s.reshape(Bt, H, T, S)
    s4 = jnp.where(mask_ref[...][:, None] == 0.0, -1e9, s4)
    s4 = s4 - jnp.max(s4, axis=-1, keepdims=True)                       # stable
    p4 = jnp.exp(s4)
    p4 = p4 * pl.reciprocal(jnp.sum(p4, axis=-1, keepdims=True),
                            approx=approx_recip)

    ctx = jnp.einsum('gts,gsd->gtd',
                     p4.reshape(G, T, S).astype(mm_dtype),
                     v_g.astype(mm_dtype),
                     preferred_element_type=jnp.float32)                # (G, T, dk)

    # ---- Merge heads back (matches torch concat order) + single out-proj ----
    ctx_flat = ctx.reshape(Bt, H, T, dk).transpose(0, 2, 1, 3).reshape(M, D)
    attn_out = jnp.dot(ctx_flat.astype(mm_dtype), wo_ref[...],
                       preferred_element_type=jnp.float32) + bo_ref[...]

    # ---- residual (dropout_1 is identity in eval mode) ----
    out_ref[...] = (x_flat + attn_out).reshape(Bt, T, D)


# -----------------------------------------------------------------------------
# Wrapper
# -----------------------------------------------------------------------------
def eventer_layer(x, mask, params, heads, b_tile=None,
                  matmul_dtype=jnp.bfloat16):
    B, T, D = x.shape
    H = heads
    dk = D // H
    S = T

    # Default tiling: aim for >=2 grid steps (>=4 when the batch allows it) so
    # v7x can shard across its 2 TensorCores and the pipeline can overlap
    # DMA with compute.
    if b_tile is None:
        target_steps = min(4, B)
        b_tile = B
        for cand in range(B, 0, -1):
            if B % cand == 0 and B // cand >= target_steps:
                b_tile = cand
                break
    assert B % b_tile == 0, "b_tile must divide B"
    grid_steps = B // b_tile

    # ---- Parameter re-layout (trace-time JAX, free) ----
    # Weights are (in, out) so the kernel does x @ W + b.  The 1/sqrt(dk)
    # attention scale is folded into Wq / bq.  Matmul weights are cast to the
    # MXU dtype; biases / norm params stay f32 (added to f32 accumulators).
    scale = 1.0 / math.sqrt(dk)
    alpha = params["alpha"].reshape(1, D).astype(jnp.float32)
    beta = params["beta"].reshape(1, D).astype(jnp.float32)
    wq = (params["wq"] * scale).astype(matmul_dtype)                    # (D, D)
    bq = (params["bq"] * scale).reshape(1, D).astype(jnp.float32)
    wkv = jnp.concatenate([params["wk"], params["wv"]],
                          axis=1).astype(matmul_dtype)                  # (D, 2D)
    bkv = jnp.concatenate([params["bk"], params["bv"]],
                          axis=0).reshape(1, 2 * D).astype(jnp.float32)
    wo = params["wo"].astype(matmul_dtype)                              # (D, D)
    bo = params["bo"].reshape(1, D).astype(jnp.float32)

    param_vals = [alpha, beta, wq, bq, wkv, bkv, wo, bo]

    def batch_spec(shape):
        nd = len(shape)
        return pl.BlockSpec((b_tile,) + tuple(shape[1:]),
                            lambda i, nd=nd: (i,) + (0,) * (nd - 1))

    def full_spec(arr):
        nd = arr.ndim
        return pl.BlockSpec(arr.shape, lambda i, nd=nd: (0,) * nd)

    # Use the exact (VPU) reciprocal for the tight-tolerance f32 path; the EUP
    # approx reciprocal on the bf16 fast path.
    approx_recip = (jnp.dtype(matmul_dtype) != jnp.dtype(jnp.float32))
    kernel = functools.partial(_eventer_layer_kernel, H, dk, D,
                               approx_recip, matmul_dtype)

    # ---- VMEM budget (explicit scoped limit; default is 16/32 MiB) ----
    mm_bytes = jnp.dtype(matmul_dtype).itemsize
    Tm = mask.shape[1]
    tile_bytes = (
        2 * 2 * b_tile * T * D * 4              # x / out, double-buffered, f32
        + 2 * b_tile * Tm * S * 4               # mask, double-buffered
        + 3 * D * D * mm_bytes + 5 * D * 4      # weights + biases + norm params
        + 5 * b_tile * T * D * max(mm_bytes, 4) # x2, q, k, v, ctx
        + 3 * b_tile * H * T * S * 4            # scores / probs intermediates
    )
    vmem_limit = int(min(64 * 1024 * 1024,
                         max(32 * 1024 * 1024, 2 * tile_bytes)))

    # ---- Cost estimate (per full call) ----
    Mtot = B * T
    flops = (2 * Mtot * D * D            # Q projection
             + 2 * Mtot * D * 2 * D      # fused K|V projection
             + 4 * B * H * T * S * dk    # scores + context
             + 2 * Mtot * D * D)         # output projection
    bytes_accessed = (4 * 2 * int(x.size) + 4 * int(mask.size)
                      + sum(int(p.size) * p.dtype.itemsize for p in param_vals))
    cost = pl.CostEstimate(flops=int(flops),
                           transcendentals=int(B * H * T * S),
                           bytes_accessed=int(bytes_accessed))

    return pl.pallas_call(
        kernel,
        out_shape=jax.ShapeDtypeStruct((B, T, D), jnp.float32),
        grid_spec=pltpu.PrefetchScalarGridSpec(
            num_scalar_prefetch=0,
            grid=(grid_steps,),
            in_specs=[batch_spec(x.shape), batch_spec(mask.shape)]
                     + [full_spec(p) for p in param_vals],
            out_specs=pl.BlockSpec((b_tile, T, D), lambda i: (i, 0, 0)),
        ),
        compiler_params=pltpu.CompilerParams(
            dimension_semantics=("parallel",),
            vmem_limit_bytes=vmem_limit),
        cost_estimate=cost,
    )(x, mask, *param_vals)


# -----------------------------------------------------------------------------
# Pure-JAX reference (mirrors the PyTorch module in eval mode)
# -----------------------------------------------------------------------------
def reference_eventer_layer(x, mask, p, heads):
    B, T, D = x.shape
    H = heads
    dk = D // H

    def norm(v, a, b):
        m = v.mean(-1, keepdims=True)
        var = ((v - m) ** 2).sum(-1, keepdims=True) / (D - 1)
        return a * (v - m) / (jnp.sqrt(var) + 1e-6) + b

    x2 = norm(x, p["alpha"], p["beta"])
    q = (x2 @ p["wq"] + p["bq"]).reshape(B, T, H, dk).transpose(0, 2, 1, 3)
    k = (x @ p["wk"] + p["bk"]).reshape(B, T, H, dk).transpose(0, 2, 1, 3)
    v = (x @ p["wv"] + p["bv"]).reshape(B, T, H, dk).transpose(0, 2, 1, 3)
    s = jnp.einsum("bhqd,bhkd->bhqk", q, k) / math.sqrt(dk)
    s = jnp.where(mask[:, None] == 0, -1e9, s)
    attn = jax.nn.softmax(s, axis=-1)
    o = jnp.einsum("bhqk,bhkd->bhqd", attn, v).transpose(0, 2, 1, 3)
    o = o.reshape(B, T, D)
    return x + (o @ p["wo"] + p["bo"])


# -----------------------------------------------------------------------------
# Main
# -----------------------------------------------------------------------------
if __name__ == "__main__":
    B, T, D, H = 2, 8, 32, 4

    key = jax.random.PRNGKey(0)
    ks = jax.random.split(key, 16)
    kit = iter(ks)

    def w(shape, scale=0.1):
        return (scale * jax.random.normal(next(kit), shape)).astype(jnp.float32)

    params = {
        "alpha": (1.0 + 0.1 * jax.random.normal(next(kit), (D,))).astype(jnp.float32),
        "beta": (0.1 * jax.random.normal(next(kit), (D,))).astype(jnp.float32),
        "wq": w((D, D)), "bq": w((D,)),
        "wk": w((D, D)), "bk": w((D,)),
        "wv": w((D, D)), "bv": w((D,)),
        "wo": w((D, D)), "bo": w((D,)),
    }

    x = jax.random.normal(next(kit), (B, T, D), jnp.float32)

    # causal mask (B, T, T); additionally mask the last key position in batch 1
    mask = jnp.tril(jnp.ones((T, T), jnp.float32))[None].repeat(B, axis=0)
    mask = mask.at[1, :, -1].set(0.0)

    ref = reference_eventer_layer(x, mask, params, H)

    # 1) bit-faithful f32 path — tight tolerance against the reference
    out_f32 = eventer_layer(x, mask, params, H, matmul_dtype=jnp.float32)
    out_f32 = jax.block_until_ready(out_f32)
    np.testing.assert_allclose(np.asarray(out_f32), np.asarray(ref),
                               rtol=1e-4, atol=1e-4)

    # 2) default bf16-MXU fast path (f32 accumulation) — loose tolerance
    out_bf16 = eventer_layer(x, mask, params, H)
    out_bf16 = jax.block_until_ready(out_bf16)
    np.testing.assert_allclose(np.asarray(out_bf16), np.asarray(ref),
                               rtol=2.5e-2, atol=2.5e-2)

    print("KERNEL_OK")
</pallas_src>

<mosaic_0001>
module attributes {stable_mosaic.version = 11 : i64} {
  func.func @_eventer_layer_kernel(%arg0: i32, %arg1: memref<1x8x32xf32, #tpu.memory_space<vmem>>, %arg2: memref<1x8x8xf32, #tpu.memory_space<vmem>>, %arg3: memref<1x32xf32, #tpu.memory_space<vmem>>, %arg4: memref<1x32xf32, #tpu.memory_space<vmem>>, %arg5: memref<32x32xf32, #tpu.memory_space<vmem>>, %arg6: memref<1x32xf32, #tpu.memory_space<vmem>>, %arg7: memref<32x64xf32, #tpu.memory_space<vmem>>, %arg8: memref<1x64xf32, #tpu.memory_space<vmem>>, %arg9: memref<32x32xf32, #tpu.memory_space<vmem>>, %arg10: memref<1x32xf32, #tpu.memory_space<vmem>>, %arg11: memref<1x8x32xf32, #tpu.memory_space<vmem>>) attributes {dimension_semantics = [#tpu.dimension_semantics<parallel>], iteration_bounds = array<i64: 2>, scalar_prefetch = 0 : i64, scratch_operands = 0 : i64, tpu.core_type = #tpu.core_type<tc>, window_params = [{transform_indices = @transform_0, window_bounds = array<i64: 1, 8, 32>}, {transform_indices = @transform_1, window_bounds = array<i64: 1, 8, 8>}, {pipeline_mode = #tpu.pipeline_mode<synchronous>, transform_indices = @transform_2, window_bounds = array<i64: 1, 32>}, {pipeline_mode = #tpu.pipeline_mode<synchronous>, transform_indices = @transform_3, window_bounds = array<i64: 1, 32>}, {pipeline_mode = #tpu.pipeline_mode<synchronous>, transform_indices = @transform_4, window_bounds = array<i64: 32, 32>}, {pipeline_mode = #tpu.pipeline_mode<synchronous>, transform_indices = @transform_5, window_bounds = array<i64: 1, 32>}, {pipeline_mode = #tpu.pipeline_mode<synchronous>, transform_indices = @transform_6, window_bounds = array<i64: 32, 64>}, {pipeline_mode = #tpu.pipeline_mode<synchronous>, transform_indices = @transform_7, window_bounds = array<i64: 1, 64>}, {pipeline_mode = #tpu.pipeline_mode<synchronous>, transform_indices = @transform_8, window_bounds = array<i64: 32, 32>}, {pipeline_mode = #tpu.pipeline_mode<synchronous>, transform_indices = @transform_9, window_bounds = array<i64: 1, 32>}, {transform_indices = @transform_10, window_bounds = array<i64: 1, 8, 32>}]} {
    %c0 = arith.constant 0 : index
    %c0_0 = arith.constant 0 : index
    %c0_1 = arith.constant 0 : index
    %0 = vector.load %arg1[%c0, %c0_0, %c0_1] : memref<1x8x32xf32, #tpu.memory_space<vmem>>, vector<1x8x32xf32>
    %1 = vector.shape_cast %0 : vector<1x8x32xf32> to vector<8x32xf32>
    %cst = arith.constant dense<0.000000e+00> : vector<8xf32>
    %2 = vector.multi_reduction <add>, %1, %cst [1] : vector<8x32xf32> to vector<8xf32>
    %3 = vector.shape_cast %2 : vector<8xf32> to vector<8x1xf32>
    %cst_2 = arith.constant 3.200000e+01 : f32
    %4 = vector.broadcast %cst_2 : f32 to vector<8x1xf32>
    %5 = arith.divf %3, %4 : vector<8x1xf32>
    %6 = vector.broadcast %5 : vector<8x1xf32> to vector<8x32xf32>
    %7 = arith.subf %1, %6 : vector<8x32xf32>
    %8 = arith.mulf %7, %7 : vector<8x32xf32>
    %cst_3 = arith.constant dense<0.000000e+00> : vector<8xf32>
    %9 = vector.multi_reduction <add>, %8, %cst_3 [1] : vector<8x32xf32> to vector<8xf32>
    %10 = vector.shape_cast %9 : vector<8xf32> to vector<8x1xf32>
    %cst_4 = arith.constant 0.0322580636 : f32
    %11 = vector.broadcast %cst_4 : f32 to vector<8x1xf32>
    %12 = arith.mulf %10, %11 : vector<8x1xf32>
    %13 = math.sqrt %12 : vector<8x1xf32>
    %cst_5 = arith.constant 9.99999997E-7 : f32
    %14 = vector.broadcast %cst_5 : f32 to vector<8x1xf32>
    %15 = arith.addf %13, %14 : vector<8x1xf32>
    %16 = tpu.reciprocal %15 : vector<8x1xf32> -> vector<8x1xf32>
    %c0_6 = arith.constant 0 : index
    %c0_7 = arith.constant 0 : index
    %17 = vector.load %arg3[%c0_6, %c0_7] : memref<1x32xf32, #tpu.memory_space<vmem>>, vector<1x32xf32>
    %18 = vector.broadcast %17 : vector<1x32xf32> to vector<8x32xf32>
    %19 = arith.mulf %18, %7 : vector<8x32xf32>
    %20 = vector.broadcast %16 : vector<8x1xf32> to vector<8x32xf32>
    %21 = arith.mulf %19, %20 : vector<8x32xf32>
    %c0_8 = arith.constant 0 : index
    %c0_9 = arith.constant 0 : index
    %22 = vector.load %arg4[%c0_8, %c0_9] : memref<1x32xf32, #tpu.memory_space<vmem>>, vector<1x32xf32>
    %23 = vector.broadcast %22 : vector<1x32xf32> to vector<8x32xf32>
    %24 = arith.addf %21, %23 : vector<8x32xf32>
    %c0_10 = arith.constant 0 : index
    %c0_11 = arith.constant 0 : index
    %25 = vector.load %arg5[%c0_10, %c0_11] : memref<32x32xf32, #tpu.memory_space<vmem>>, vector<32x32xf32>
    %cst_12 = arith.constant dense<0.000000e+00> : vector<8x32xf32>
    %26 = tpu.matmul %24, %25, %cst_12 {dimension_numbers = #tpu.dot_dimension_numbers<[1], [0], [0], [1], [0, 0, 1, 1], [], []>} : vector<8x32xf32>, vector<32x32xf32>, vector<8x32xf32> -> vector<8x32xf32>
    %c0_13 = arith.constant 0 : index
    %c0_14 = arith.constant 0 : index
    %27 = vector.load %arg6[%c0_13, %c0_14] : memref<1x32xf32, #tpu.memory_space<vmem>>, vector<1x32xf32>
    %28 = vector.broadcast %27 : vector<1x32xf32> to vector<8x32xf32>
    %29 = arith.addf %26, %28 : vector<8x32xf32>
    %c0_15 = arith.constant 0 : index
    %c0_16 = arith.constant 0 : index
    %30 = vector.load %arg7[%c0_15, %c0_16] : memref<32x64xf32, #tpu.memory_space<vmem>>, vector<32x64xf32>
    %cst_17 = arith.constant dense<0.000000e+00> : vector<8x64xf32>
    %31 = tpu.matmul %1, %30, %cst_17 {dimension_numbers = #tpu.dot_dimension_numbers<[1], [0], [0], [1], [0, 0, 1, 1], [], []>} : vector<8x32xf32>, vector<32x64xf32>, vector<8x64xf32> -> vector<8x64xf32>
    %c0_18 = arith.constant 0 : index
    %c0_19 = arith.constant 0 : index
    %32 = vector.load %arg8[%c0_18, %c0_19] : memref<1x64xf32, #tpu.memory_space<vmem>>, vector<1x64xf32>
    %33 = vector.broadcast %32 : vector<1x64xf32> to vector<8x64xf32>
    %34 = arith.addf %31, %33 : vector<8x64xf32>
    %35 = vector.extract_strided_slice %34 {offsets = [0, 0], sizes = [8, 32], strides = [1, 1]} : vector<8x64xf32> to vector<8x32xf32>
    %36 = vector.extract_strided_slice %34 {offsets = [0, 32], sizes = [8, 32], strides = [1, 1]} : vector<8x64xf32> to vector<8x32xf32>
    %37 = vector.shape_cast %29 : vector<8x32xf32> to vector<1x8x4x8xf32>
    %38 = tpu.transpose %37, [0, 2, 1, 3] : vector<1x8x4x8xf32> -> vector<1x4x8x8xf32>
    %39 = vector.shape_cast %38 : vector<1x4x8x8xf32> to vector<4x8x8xf32>
    %40 = vector.shape_cast %35 : vector<8x32xf32> to vector<1x8x4x8xf32>
    %41 = tpu.transpose %40, [0, 2, 1, 3] : vector<1x8x4x8xf32> -> vector<1x4x8x8xf32>
    %42 = vector.shape_cast %41 : vector<1x4x8x8xf32> to vector<4x8x8xf32>
    %43 = vector.shape_cast %36 : vector<8x32xf32> to vector<1x8x4x8xf32>
    %44 = tpu.transpose %43, [0, 2, 1, 3] : vector<1x8x4x8xf32> -> vector<1x4x8x8xf32>
    %45 = vector.shape_cast %44 : vector<1x4x8x8xf32> to vector<4x8x8xf32>
    "tpu.trace_start"() <{level = 10 : i32, message = "gtd,gsd->gts"}> : () -> ()
    %cst_20 = arith.constant dense<0.000000e+00> : vector<4x8x8xf32>
    %46 = tpu.matmul %39, %42, %cst_20 {dimension_numbers = #tpu.dot_dimension_numbers<[2], [2], [1], [1], [0, 0, 0, 1, 1, 1], [0], [0]>} : vector<4x8x8xf32>, vector<4x8x8xf32>, vector<4x8x8xf32> -> vector<4x8x8xf32>
    "tpu.trace_stop"() : () -> ()
    %47 = vector.shape_cast %46 : vector<4x8x8xf32> to vector<1x4x8x8xf32>
    %c0_21 = arith.constant 0 : index
    %c0_22 = arith.constant 0 : index
    %c0_23 = arith.constant 0 : index
    %48 = vector.load %arg2[%c0_21, %c0_22, %c0_23] : memref<1x8x8xf32, #tpu.memory_space<vmem>>, vector<1x8x8xf32>
    %49 = vector.shape_cast %48 : vector<1x8x8xf32> to vector<1x1x8x8xf32>
    %cst_24 = arith.constant 0.000000e+00 : f32
    %50 = vector.broadcast %cst_24 : f32 to vector<1x1x8x8xf32>
    %51 = arith.cmpf oeq, %49, %50 : vector<1x1x8x8xf32>
    %cst_25 = arith.constant -1.000000e+09 : f32
    %52 = vector.shape_cast %51 : vector<1x1x8x8xi1> to vector<1x1x8x8xi1>
    %53 = vector.broadcast %52 : vector<1x1x8x8xi1> to vector<1x4x8x8xi1>
    %54 = vector.broadcast %cst_25 : f32 to vector<1x4x8x8xf32>
    %55 = arith.select %53, %54, %47 : vector<1x4x8x8xi1>, vector<1x4x8x8xf32>
    %cst_26 = arith.constant dense<0xFF800000> : vector<1x4x8xf32>
    %56 = vector.multi_reduction <maximumf>, %55, %cst_26 [3] : vector<1x4x8x8xf32> to vector<1x4x8xf32>
    %57 = vector.shape_cast %56 : vector<1x4x8xf32> to vector<1x4x8x1xf32>
    %58 = vector.broadcast %57 : vector<1x4x8x1xf32> to vector<1x4x8x8xf32>
    %59 = arith.subf %55, %58 : vector<1x4x8x8xf32>
    %60 = math.exp %59 : vector<1x4x8x8xf32>
    %cst_27 = arith.constant dense<0.000000e+00> : vector<1x4x8xf32>
    %61 = vector.multi_reduction <add>, %60, %cst_27 [3] : vector<1x4x8x8xf32> to vector<1x4x8xf32>
    %62 = vector.shape_cast %61 : vector<1x4x8xf32> to vector<1x4x8x1xf32>
    %63 = tpu.reciprocal %62 : vector<1x4x8x1xf32> -> vector<1x4x8x1xf32>
    %64 = vector.broadcast %63 : vector<1x4x8x1xf32> to vector<1x4x8x8xf32>
    %65 = arith.mulf %60, %64 : vector<1x4x8x8xf32>
    %66 = vector.shape_cast %65 : vector<1x4x8x8xf32> to vector<4x8x8xf32>
    "tpu.trace_start"() <{level = 10 : i32, message = "gts,gsd->gtd"}> : () -> ()
    %cst_28 = arith.constant dense<0.000000e+00> : vector<4x8x8xf32>
    %67 = tpu.matmul %66, %45, %cst_28 {dimension_numbers = #tpu.dot_dimension_numbers<[2], [1], [1], [2], [0, 0, 0, 1, 1, 2], [0], [0]>} : vector<4x8x8xf32>, vector<4x8x8xf32>, vector<4x8x8xf32> -> vector<4x8x8xf32>
    "tpu.trace_stop"() : () -> ()
    %68 = vector.shape_cast %67 : vector<4x8x8xf32> to vector<1x4x8x8xf32>
    %69 = tpu.transpose %68, [0, 2, 1, 3] : vector<1x4x8x8xf32> -> vector<1x8x4x8xf32>
    %70 = vector.shape_cast %69 : vector<1x8x4x8xf32> to vector<8x32xf32>
    %c0_29 = arith.constant 0 : index
    %c0_30 = arith.constant 0 : index
    %71 = vector.load %arg9[%c0_29, %c0_30] : memref<32x32xf32, #tpu.memory_space<vmem>>, vector<32x32xf32>
    %cst_31 = arith.constant dense<0.000000e+00> : vector<8x32xf32>
    %72 = tpu.matmul %70, %71, %cst_31 {dimension_numbers = #tpu.dot_dimension_numbers<[1], [0], [0], [1], [0, 0, 1, 1], [], []>} : vector<8x32xf32>, vector<32x32xf32>, vector<8x32xf32> -> vector<8x32xf32>
    %c0_32 = arith.constant 0 : index
    %c0_33 = arith.constant 0 : index
    %73 = vector.load %arg10[%c0_32, %c0_33] : memref<1x32xf32, #tpu.memory_space<vmem>>, vector<1x32xf32>
    %74 = vector.broadcast %73 : vector<1x32xf32> to vector<8x32xf32>
    %75 = arith.addf %72, %74 : vector<8x32xf32>
    %76 = arith.addf %1, %75 : vector<8x32xf32>
    %77 = vector.shape_cast %76 : vector<8x32xf32> to vector<1x8x32xf32>
    %c0_34 = arith.constant 0 : index
    %c0_35 = arith.constant 0 : index
    %c0_36 = arith.constant 0 : index
    %78 = vector.load %arg11[%c0_34, %c0_35, %c0_36] : memref<1x8x32xf32, #tpu.memory_space<vmem>>, vector<1x8x32xf32>
    tpu.vector_store %arg11[%c0_34, %c0_35, %c0_36], %77 {strides = array<i32>} : memref<1x8x32xf32, #tpu.memory_space<vmem>>, vector<1x8x32xf32>,
    return
  }
  func.func @transform_0(%arg0: i32) -> (i32, i32, i32) {
    %c0_i32 = arith.constant 0 : i32
    %c0_i32_0 = arith.constant 0 : i32
    %c0_i32_1 = arith.constant 0 : i32
    return %arg0, %c0_i32, %c0_i32_0 : i32, i32, i32
  }
  func.func @transform_1(%arg0: i32) -> (i32, i32, i32) {
    %c0_i32 = arith.constant 0 : i32
    %c0_i32_0 = arith.constant 0 : i32
    %c0_i32_1 = arith.constant 0 : i32
    return %arg0, %c0_i32, %c0_i32_0 : i32, i32, i32
  }
  func.func @transform_2(%arg0: i32) -> (i32, i32) {
    %c0_i32 = arith.constant 0 : i32
    %c0_i32_0 = arith.constant 0 : i32
    %c0_i32_1 = arith.constant 0 : i32
    return %c0_i32, %c0_i32_0 : i32, i32
  }
  func.func @transform_3(%arg0: i32) -> (i32, i32) {
    %c0_i32 = arith.constant 0 : i32
    %c0_i32_0 = arith.constant 0 : i32
    %c0_i32_1 = arith.constant 0 : i32
    return %c0_i32, %c0_i32_0 : i32, i32
  }
  func.func @transform_4(%arg0: i32) -> (i32, i32) {
    %c0_i32 = arith.constant 0 : i32
    %c0_i32_0 = arith.constant 0 : i32
    %c0_i32_1 = arith.constant 0 : i32
    return %c0_i32, %c0_i32_0 : i32, i32
  }
  func.func @transform_5(%arg0: i32) -> (i32, i32) {
    %c0_i32 = arith.constant 0 : i32
    %c0_i32_0 = arith.constant 0 : i32
    %c0_i32_1 = arith.constant 0 : i32
    return %c0_i32, %c0_i32_0 : i32, i32
  }
  func.func @transform_6(%arg0: i32) -> (i32, i32) {
    %c0_i32 = arith.constant 0 : i32
    %c0_i32_0 = arith.constant 0 : i32
    %c0_i32_1 = arith.constant 0 : i32
    return %c0_i32, %c0_i32_0 : i32, i32
  }
  func.func @transform_7(%arg0: i32) -> (i32, i32) {
    %c0_i32 = arith.constant 0 : i32
    %c0_i32_0 = arith.constant 0 : i32
    %c0_i32_1 = arith.constant 0 : i32
    return %c0_i32, %c0_i32_0 : i32, i32
  }
  func.func @transform_8(%arg0: i32) -> (i32, i32) {
    %c0_i32 = arith.constant 0 : i32
    %c0_i32_0 = arith.constant 0 : i32
    %c0_i32_1 = arith.constant 0 : i32
    return %c0_i32, %c0_i32_0 : i32, i32
  }
  func.func @transform_9(%arg0: i32) -> (i32, i32) {
    %c0_i32 = arith.constant 0 : i32
    %c0_i32_0 = arith.constant 0 : i32
    %c0_i32_1 = arith.constant 0 : i32
    return %c0_i32, %c0_i32_0 : i32, i32
  }
  func.func @transform_10(%arg0: i32) -> (i32, i32, i32) {
    %c0_i32 = arith.constant 0 : i32
    %c0_i32_0 = arith.constant 0 : i32
    %c0_i32_1 = arith.constant 0 : i32
    return %arg0, %c0_i32, %c0_i32_0 : i32, i32, i32
  }
}

</mosaic_0001>

<llo_original>
// kernel: tpu_custom_call.1
$region0: #{tpu_custom_call.1}
  #allocation0 [shape = 'u32[]', space=smem, size = 0x4, offset = 0x4, fixed_abs, tag = 'smem constant byte address 0x4 - core index']
  #allocation1 [shape = 'u32[144,128]{1,0:T(1,128)}', space=vmem, size = 0x12000, scoped, tag = 'internal scratch']
  %s0 = inlined_call_operand.hbm [shape: f32[2,8,32], index: 0, kind: input, shape index: {}]
  %s1 = inlined_call_operand.hbm [shape: f32[2,8,8], index: 1, kind: input, shape index: {}]
  %s2 = inlined_call_operand.vmem [shape: f32[1,32], index: 2, kind: input, shape index: {}]
  %s3 = inlined_call_operand.vmem [shape: f32[1,32], index: 3, kind: input, shape index: {}]
  %s4 = inlined_call_operand.hbm [shape: f32[32,32], index: 4, kind: input, shape index: {}]
  %s5 = inlined_call_operand.vmem [shape: f32[1,32], index: 5, kind: input, shape index: {}]
  %s6 = inlined_call_operand.hbm [shape: f32[32,64], index: 6, kind: input, shape index: {}]
  %s7 = inlined_call_operand.vmem [shape: f32[1,64], index: 7, kind: input, shape index: {}]
  %s8 = inlined_call_operand.hbm [shape: f32[32,32], index: 8, kind: input, shape index: {}]
  %s9 = inlined_call_operand.vmem [shape: f32[1,32], index: 9, kind: input, shape index: {}]
  %s10 = inlined_call_operand.hbm [shape: f32[2,8,32], index: 10, kind: output, shape index: {}]
  %s11 = sld [smem:[#allocation0]]
  $region93: #{tpu_custom_call.1} parent=0
    _
  %s13 = ssub.s32 1, %s11
  %s14 = scalar_select 0, %s13, %s11
  $region1: #{tpu_custom_call.1} parent=0
    #allocation2 [shape = 'u8[8192]{0}', space=vmem, size = 0x2000, scoped, tag = 'input window, operand 0']
    #allocation3 [shape = 's32[2]{0}', space=sflag, size = 0x8, scoped, tag = 'scoped memory for tpu_custom_call.1']
    #allocation4 [shape = 's32[2]{0}', space=sflag, size = 0x8, scoped, tag = 'scoped memory for tpu_custom_call.1']
    #allocation5 [shape = 'u8[8192]{0}', space=vmem, size = 0x2000, scoped, tag = 'input window, operand 1']
    #allocation6 [shape = 's32[2]{0}', space=sflag, size = 0x8, scoped, tag = 'scoped memory for tpu_custom_call.1']
    #allocation7 [shape = 'u8[16384]{0}', space=vmem, size = 0x4000, scoped, tag = 'input window, operand 4, single buffered']
    #allocation8 [shape = 'u8[16384]{0}', space=vmem, size = 0x4000, scoped, tag = 'input window, operand 6, single buffered']
    #allocation9 [shape = 's32[1]{0}', space=sflag, size = 0x4, scoped, tag = 'scoped memory for tpu_custom_call.1']
    #allocation10 [shape = 'u8[16384]{0}', space=vmem, size = 0x4000, scoped, tag = 'input window, operand 8, single buffered']
    #allocation11 [shape = 'u8[8192]{0}', space=vmem, size = 0x2000, scoped, tag = 'output window, operand 0']
    %15 = vsyncpa [#allocation3], 0
    %s16 = scalar_lea.sflag [#allocation3], 1
    %17 = vsyncpa %s16, 0
    %18 = vsyncpa [#allocation6], 0
    %s19 = scalar_lea.sflag [#allocation6], 1
    %20 = vsyncpa %s19, 0
    %21 = vsyncpa [#allocation9], 0
    %22 = vsyncpa [#allocation4], 0
    %s23 = scalar_lea.sflag [#allocation4], 1
    %24 = vsyncpa %s23, 0
    loop: start=0, step=1, limit=4
    $region2: #{tpu_custom_call.1} parent=1 // loop_pre_header
      _
    $region3: #{tpu_custom_call.1} parent=1 // loop_header
      %s26 = sphi 0, %s30
      %p27 = scmp.ge.s32.totalorder %s26, 4
      %s36 = sphi 0, %s38
      %s39 = sphi 0, %s36
      %s40 = sphi 0, %s39
      %s56 = sphi 0, %s40
      %s62 = sphi 0, %s64
      %s65 = sphi 0, %s62
      %s66 = sphi 0, %s65
      %s82 = sphi 0, %s66
      %s86 = sphi 0, %s86
      %s88 = sphi 0, %s86
      %s89 = sphi 0, %s88
      %s103 = sphi 0, %s89
      %s107 = sphi 0, %s107
      %s109 = sphi 0, %s107
      %s110 = sphi 0, %s109
      %s124 = sphi 0, %s110
      %s128 = sphi 0, %s128
      %s130 = sphi 0, %s128
      %s131 = sphi 0, %s130
      %s145 = sphi 0, %s131
      %s149 = sphi 0, %s149
      %s151 = sphi 0, %s149
      %s152 = sphi 0, %s151
      %s166 = sphi 0, %s152
      %s170 = sphi 0, %s170
      %s172 = sphi 0, %s170
      %s173 = sphi 0, %s172
      %s187 = sphi 0, %s173
      %s191 = sphi 0, %s191
      %s193 = sphi 0, %s191
      %s194 = sphi 0, %s193
      %s208 = sphi 0, %s194
      %s212 = sphi 0, %s212
      %s214 = sphi 0, %s212
      %s215 = sphi 0, %s214
      %s229 = sphi 0, %s215
      %s233 = sphi 0, %s233
      %s235 = sphi 0, %s233
      %s236 = sphi 0, %s235
      %s250 = sphi 0, %s236
      %s256 = sphi 0, %s258
      %s259 = sphi 0, %s256
      %s260 = sphi 0, %s259
      %s276 = sphi 0, %s260
    $region4: #{tpu_custom_call.1} parent=1 // loop_header_branch
      %29 = sbr.rel (%p27) target = $region8
    $region5: #{tpu_custom_call.1} parent=1 // loop_body
      %s31 = ssub.s32 %s26, 1
      %s32 = ssub.s32 %s26, 2
      %s33 = sadd.s32 %s26, 1
      %s34 = ssub.s32 %s26, %s33
      %p35 = scmp.eq.s32.totalorder %s34, 0
      %s37 = sadd.s32 %s36, 1
      %s38 = scalar_select %p35, %s36, %s37
      %p41 = pneg %p35
      %p42 = scmp.eq.s32.totalorder %s26, 1
      %p43 = por %p41, %p42
      %p44 = scmp.ne.s32.totalorder %s36, %s39
      %p45 = scmp.eq.s32.totalorder %s26, 0
      %p46 = por %p44, %p45
      %p47 = scmp.ne.s32.totalorder %s36, %s39
      %p48 = scmp.eq.s32.totalorder %s31, 1
      %p49 = por %p47, %p48
      %p50 = scmp.ne.s32.totalorder %s39, %s40
      %p51 = scmp.eq.s32.totalorder %s31, 0
      %p52 = por %p50, %p51
      %p53 = scmp.ne.s32.totalorder %s39, %s40
      %p54 = scmp.eq.s32.totalorder %s32, 1
      %p55 = por %p53, %p54
      %p57 = scmp.ne.s32.totalorder %s40, %s56
      %p58 = scmp.eq.s32.totalorder %s32, 0
      %p59 = por %p57, %p58
      %s60 = ssub.s32 %s26, %s33
      %p61 = scmp.eq.s32.totalorder %s60, 0
      %s63 = sadd.s32 %s62, 1
      %s64 = scalar_select %p61, %s62, %s63
      %p67 = pneg %p61
      %p68 = scmp.eq.s32.totalorder %s26, 1
      %p69 = por %p67, %p68
      %p70 = scmp.ne.s32.totalorder %s62, %s65
      %p71 = scmp.eq.s32.totalorder %s26, 0
      %p72 = por %p70, %p71
      %p73 = scmp.ne.s32.totalorder %s62, %s65
      %p74 = scmp.eq.s32.totalorder %s31, 1
      %p75 = por %p73, %p74
      %p76 = scmp.ne.s32.totalorder %s65, %s66
      %p77 = scmp.eq.s32.totalorder %s31, 0
      %p78 = por %p76, %p77
      %p79 = scmp.ne.s32.totalorder %s65, %s66
      %p80 = scmp.eq.s32.totalorder %s32, 1
      %p81 = por %p79, %p80
      %p83 = scmp.ne.s32.totalorder %s66, %s82
      %p84 = scmp.eq.s32.totalorder %s32, 0
      %p85 = por %p83, %p84
      %s87 = sadd.s32 %s86, 1
      %p90 = scmp.eq.s32.totalorder %s26, 1
      %p91 = scmp.ne.s32.totalorder %s86, %s88
      %p92 = scmp.eq.s32.totalorder %s26, 0
      %p93 = por %p91, %p92
      %p94 = scmp.ne.s32.totalorder %s86, %s88
      %p95 = scmp.eq.s32.totalorder %s31, 1
      %p96 = por %p94, %p95
      %p97 = scmp.ne.s32.totalorder %s88, %s89
      %p98 = scmp.eq.s32.totalorder %s31, 0
      %p99 = por %p97, %p98
      %p100 = scmp.ne.s32.totalorder %s88, %s89
      %p101 = scmp.eq.s32.totalorder %s32, 1
      %p102 = por %p100, %p101
      %p104 = scmp.ne.s32.totalorder %s89, %s103
      %p105 = scmp.eq.s32.totalorder %s32, 0
      %p106 = por %p104, %p105
      %s108 = sadd.s32 %s107, 1
      %p111 = scmp.eq.s32.totalorder %s26, 1
      %p112 = scmp.ne.s32.totalorder %s107, %s109
      %p113 = scmp.eq.s32.totalorder %s26, 0
      %p114 = por %p112, %p113
      %p115 = scmp.ne.s32.totalorder %s107, %s109
      %p116 = scmp.eq.s32.totalorder %s31, 1
      %p117 = por %p115, %p116
      %p118 = scmp.ne.s32.totalorder %s109, %s110
      %p119 = scmp.eq.s32.totalorder %s31, 0
      %p120 = por %p118, %p119
      %p121 = scmp.ne.s32.totalorder %s109, %s110
      %p122 = scmp.eq.s32.totalorder %s32, 1
      %p123 = por %p121, %p122
      %p125 = scmp.ne.s32.totalorder %s110, %s124
      %p126 = scmp.eq.s32.totalorder %s32, 0
      %p127 = por %p125, %p126
      %s129 = sadd.s32 %s128, 1
      %p132 = scmp.eq.s32.totalorder %s26, 1
      %p133 = scmp.ne.s32.totalorder %s128, %s130
      %p134 = scmp.eq.s32.totalorder %s26, 0
      %p135 = por %p133, %p134
      %p136 = scmp.ne.s32.totalorder %s128, %s130
      %p137 = scmp.eq.s32.totalorder %s31, 1
      %p138 = por %p136, %p137
      %p139 = scmp.ne.s32.totalorder %s130, %s131
      %p140 = scmp.eq.s32.totalorder %s31, 0
      %p141 = por %p139, %p140
      %p142 = scmp.ne.s32.totalorder %s130, %s131
      %p143 = scmp.eq.s32.totalorder %s32, 1
      %p144 = por %p142, %p143
      %p146 = scmp.ne.s32.totalorder %s131, %s145
      %p147 = scmp.eq.s32.totalorder %s32, 0
      %p148 = por %p146, %p147
      %s150 = sadd.s32 %s149, 1
      %p153 = scmp.eq.s32.totalorder %s26, 1
      %p154 = scmp.ne.s32.totalorder %s149, %s151
      %p155 = scmp.eq.s32.totalorder %s26, 0
      %p156 = por %p154, %p155
      %p157 = scmp.ne.s32.totalorder %s149, %s151
      %p158 = scmp.eq.s32.totalorder %s31, 1
      %p159 = por %p157, %p158
      %p160 = scmp.ne.s32.totalorder %s151, %s152
      %p161 = scmp.eq.s32.totalorder %s31, 0
      %p162 = por %p160, %p161
      %p163 = scmp.ne.s32.totalorder %s151, %s152
      %p164 = scmp.eq.s32.totalorder %s32, 1
      %p165 = por %p163, %p164
      %p167 = scmp.ne.s32.totalorder %s152, %s166
      %p168 = scmp.eq.s32.totalorder %s32, 0
      %p169 = por %p167, %p168
      %s171 = sadd.s32 %s170, 1
      %p174 = scmp.eq.s32.totalorder %s26, 1
      %p175 = scmp.ne.s32.totalorder %s170, %s172
      %p176 = scmp.eq.s32.totalorder %s26, 0
      %p177 = por %p175, %p176
      %p178 = scmp.ne.s32.totalorder %s170, %s172
      %p179 = scmp.eq.s32.totalorder %s31, 1
      %p180 = por %p178, %p179
      %p181 = scmp.ne.s32.totalorder %s172, %s173
      %p182 = scmp.eq.s32.totalorder %s31, 0
      %p183 = por %p181, %p182
      %p184 = scmp.ne.s32.totalorder %s172, %s173
      %p185 = scmp.eq.s32.totalorder %s32, 1
      %p186 = por %p184, %p185
      %p188 = scmp.ne.s32.totalorder %s173, %s187
      %p189 = scmp.eq.s32.totalorder %s32, 0
      %p190 = por %p188, %p189
      %s192 = sadd.s32 %s191, 1
      %p195 = scmp.eq.s32.totalorder %s26, 1
      %p196 = scmp.ne.s32.totalorder %s191, %s193
      %p197 = scmp.eq.s32.totalorder %s26, 0
      %p198 = por %p196, %p197
      %p199 = scmp.ne.s32.totalorder %s191, %s193
      %p200 = scmp.eq.s32.totalorder %s31, 1
      %p201 = por %p199, %p200
      %p202 = scmp.ne.s32.totalorder %s193, %s194
      %p203 = scmp.eq.s32.totalorder %s31, 0
      %p204 = por %p202, %p203
      %p205 = scmp.ne.s32.totalorder %s193, %s194
      %p206 = scmp.eq.s32.totalorder %s32, 1
      %p207 = por %p205, %p206
      %p209 = scmp.ne.s32.totalorder %s194, %s208
      %p210 = scmp.eq.s32.totalorder %s32, 0
      %p211 = por %p209, %p210
      %s213 = sadd.s32 %s212, 1
      %p216 = scmp.eq.s32.totalorder %s26, 1
      %p217 = scmp.ne.s32.totalorder %s212, %s214
      %p218 = scmp.eq.s32.totalorder %s26, 0
      %p219 = por %p217, %p218
      %p220 = scmp.ne.s32.totalorder %s212, %s214
      %p221 = scmp.eq.s32.totalorder %s31, 1
      %p222 = por %p220, %p221
      %p223 = scmp.ne.s32.totalorder %s214, %s215
      %p224 = scmp.eq.s32.totalorder %s31, 0
      %p225 = por %p223, %p224
      %p226 = scmp.ne.s32.totalorder %s214, %s215
      %p227 = scmp.eq.s32.totalorder %s32, 1
      %p228 = por %p226, %p227
      %p230 = scmp.ne.s32.totalorder %s215, %s229
      %p231 = scmp.eq.s32.totalorder %s32, 0
      %p232 = por %p230, %p231
      %s234 = sadd.s32 %s233, 1
      %p237 = scmp.eq.s32.totalorder %s26, 1
      %p238 = scmp.ne.s32.totalorder %s233, %s235
      %p239 = scmp.eq.s32.totalorder %s26, 0
      %p240 = por %p238, %p239
      %p241 = scmp.ne.s32.totalorder %s233, %s235
      %p242 = scmp.eq.s32.totalorder %s31, 1
      %p243 = por %p241, %p242
      %p244 = scmp.ne.s32.totalorder %s235, %s236
      %p245 = scmp.eq.s32.totalorder %s31, 0
      %p246 = por %p244, %p245
      %p247 = scmp.ne.s32.totalorder %s235, %s236
      %p248 = scmp.eq.s32.totalorder %s32, 1
      %p249 = por %p247, %p248
      %p251 = scmp.ne.s32.totalorder %s236, %s250
      %p252 = scmp.eq.s32.totalorder %s32, 0
      %p253 = por %p251, %p252
      %s254 = ssub.s32 %s26, %s33
      %p255 = scmp.eq.s32.totalorder %s254, 0
      %s257 = sadd.s32 %s256, 1
      %s258 = scalar_select %p255, %s256, %s257
      %p261 = pneg %p255
      %p262 = scmp.eq.s32.totalorder %s26, 1
      %p263 = por %p261, %p262
      %p264 = scmp.ne.s32.totalorder %s256, %s259
      %p265 = scmp.eq.s32.totalorder %s26, 0
      %p266 = por %p264, %p265
      %p267 = scmp.ne.s32.totalorder %s256, %s259
      %p268 = scmp.eq.s32.totalorder %s31, 1
      %p269 = por %p267, %p268
      %p270 = scmp.ne.s32.totalorder %s259, %s260
      %p271 = scmp.eq.s32.totalorder %s31, 0
      %p272 = por %p270, %p271
      %p273 = scmp.ne.s32.totalorder %s259, %s260
      %p274 = scmp.eq.s32.totalorder %s32, 1
      %p275 = por %p273, %p274
      %p277 = scmp.ne.s32.totalorder %s260, %s276
      %p278 = scmp.eq.s32.totalorder %s32, 0
      %p279 = por %p277, %p278
      %p280 = scmp.le.s32.totalorder 1, %s26
      %p281 = scmp.lt.s32.totalorder %s26, 3
      %p282 = pnand %p280, %p281
      %p283 = pneg %p282
      // Predicated region
      $region9: #{tpu_custom_call.1} parent=5 // pred_check
        _
      $region10: #{tpu_custom_call.1} parent=5 // pred_check_branch
        %285 = sbr.rel (%p282) target = $region12
      $region11: #{tpu_custom_call.1} parent=5 // pred_region
        %s286 = ssub.s32 %s26, 1
        // Predicated region
        $region13: #{tpu_custom_call.1} parent=11 // pred_check
          %p287 = pneg %p99
        $region14: #{tpu_custom_call.1} parent=11 // pred_check_branch
          %289 = sbr.rel (%p287) target = $region16
        $region15: #{tpu_custom_call.1} parent=11 // pred_region
          _
        $region16: #{tpu_custom_call.1} parent=11 // pred_fallthru
          _
        // Predicated region
        $region17: #{tpu_custom_call.1} parent=11 // pred_check
          %p290 = pneg %p120
        $region18: #{tpu_custom_call.1} parent=11 // pred_check_branch
          %292 = sbr.rel (%p290) target = $region20
        $region19: #{tpu_custom_call.1} parent=11 // pred_region
          _
        $region20: #{tpu_custom_call.1} parent=11 // pred_fallthru
          _
        // Predicated region
        $region21: #{tpu_custom_call.1} parent=11 // pred_check
          %p293 = pneg %p141
        $region22: #{tpu_custom_call.1} parent=11 // pred_check_branch
          %295 = sbr.rel (%p293) target = $region24
        $region23: #{tpu_custom_call.1} parent=11 // pred_region
          %s297 = ssub.s32 512, 512
          %298 = vsyncadd [#allocation6], %s297
          %s299 = sshll.u32 [#allocation7], 4
          %s300 = int_to_ptr.vmem [resolvable:$true] %s299
          %305 = dma.hbm_to_vmem [thread:$0]  %s4, 512, %s300, [#allocation6], 128, 128, 8
        $region24: #{tpu_custom_call.1} parent=11 // pred_fallthru
          _
        // Predicated region
        $region25: #{tpu_custom_call.1} parent=11 // pred_check
          %p306 = pneg %p162
        $region26: #{tpu_custom_call.1} parent=11 // pred_check_branch
          %308 = sbr.rel (%p306) target = $region28
        $region27: #{tpu_custom_call.1} parent=11 // pred_region
          _
        $region28: #{tpu_custom_call.1} parent=11 // pred_fallthru
          _
        // Predicated region
        $region29: #{tpu_custom_call.1} parent=11 // pred_check
          %p309 = pneg %p183
        $region30: #{tpu_custom_call.1} parent=11 // pred_check_branch
          %311 = sbr.rel (%p309) target = $region32
        $region31: #{tpu_custom_call.1} parent=11 // pred_region
          %s313 = ssub.s32 512, 512
          %314 = vsyncadd [#allocation9], %s313
          %s315 = sshll.u32 [#allocation8], 4
          %s316 = int_to_ptr.vmem [resolvable:$true] %s315
          %321 = dma.hbm_to_vmem [thread:$0]  %s6, 512, %s316, [#allocation9], 128, 128, 8
        $region32: #{tpu_custom_call.1} parent=11 // pred_fallthru
          _
        // Predicated region
        $region33: #{tpu_custom_call.1} parent=11 // pred_check
          %p322 = pneg %p204
        $region34: #{tpu_custom_call.1} parent=11 // pred_check_branch
          %324 = sbr.rel (%p322) target = $region36
        $region35: #{tpu_custom_call.1} parent=11 // pred_region
          _
        $region36: #{tpu_custom_call.1} parent=11 // pred_fallthru
          _
        // Predicated region
        $region37: #{tpu_custom_call.1} parent=11 // pred_check
          %p325 = pneg %p225
        $region38: #{tpu_custom_call.1} parent=11 // pred_check_branch
          %327 = sbr.rel (%p325) target = $region40
        $region39: #{tpu_custom_call.1} parent=11 // pred_region
          %s329 = ssub.s32 512, 512
          %330 = vsyncadd [#allocation9], %s329
          %s331 = sshll.u32 [#allocation10], 4
          %s332 = int_to_ptr.vmem [resolvable:$true] %s331
          %337 = dma.hbm_to_vmem [thread:$0]  %s8, 512, %s332, [#allocation9], 128, 128, 8
        $region40: #{tpu_custom_call.1} parent=11 // pred_fallthru
          _
        // Predicated region
        $region41: #{tpu_custom_call.1} parent=11 // pred_check
          %p338 = pneg %p246
        $region42: #{tpu_custom_call.1} parent=11 // pred_check_branch
          %340 = sbr.rel (%p338) target = $region44
        $region43: #{tpu_custom_call.1} parent=11 // pred_region
          _
        $region44: #{tpu_custom_call.1} parent=11 // pred_fallthru
          _
      $region12: #{tpu_custom_call.1} parent=5 // pred_fallthru
        _
      %p341 = scmp.lt.s32.totalorder %s26, 2
      // Predicated region
      $region45: #{tpu_custom_call.1} parent=5 // pred_check
        %p342 = pneg %p341
      $region46: #{tpu_custom_call.1} parent=5 // pred_check_branch
        %344 = sbr.rel (%p342) target = $region48
      $region47: #{tpu_custom_call.1} parent=5 // pred_region
        // Predicated region
        $region49: #{tpu_custom_call.1} parent=47 // pred_check
          %p345 = pneg %p46
        $region50: #{tpu_custom_call.1} parent=47 // pred_check_branch
          %347 = sbr.rel (%p345) target = $region52
        $region51: #{tpu_custom_call.1} parent=47 // pred_region
          %s348 = sand.u32 %s36, 1
          %s349 = scalar_lea.sflag [#allocation3], %s348
          %s350 = sand.u32 %s36, 1
          %s351 = smul.addr %s350, 8
          %s352 = scalar_lea.vmem [#allocation2], %s351
          %s354 = ssub.s32 128, 128
          %355 = vsyncadd %s349, %s354
          %s356 = smul.addr %s26, 128
          %s357 = scalar_lea.hbm %s0, %s356
          %s359 = sshll.u32 %s352, 4
          %s360 = int_to_ptr.vmem [resolvable:$true] %s359
          %362 = dma.hbm_to_vmem [thread:$0]  %s357, 128, %s360, %s349
        $region52: #{tpu_custom_call.1} parent=47 // pred_fallthru
          _
        // Predicated region
        $region53: #{tpu_custom_call.1} parent=47 // pred_check
          %p363 = pneg %p72
        $region54: #{tpu_custom_call.1} parent=47 // pred_check_branch
          %365 = sbr.rel (%p363) target = $region56
        $region55: #{tpu_custom_call.1} parent=47 // pred_region
          %s366 = sand.u32 %s26, 1
          %s367 = scalar_lea.sflag [#allocation6], %s366
          %s368 = sand.u32 %s62, 1
          %s369 = smul.addr %s368, 8
          %s370 = scalar_lea.vmem [#allocation5], %s369
          %s372 = ssub.s32 128, 128
          %373 = vsyncadd %s367, %s372
          %s374 = smul.addr %s26, 128
          %s375 = scalar_lea.hbm %s1, %s374
          %s377 = sshll.u32 %s370, 4
          %s378 = int_to_ptr.vmem [resolvable:$true] %s377
          %380 = dma.hbm_to_vmem [thread:$0]  %s375, 128, %s378, %s367
        $region56: #{tpu_custom_call.1} parent=47 // pred_fallthru
          _
      $region48: #{tpu_custom_call.1} parent=5 // pred_fallthru
        _
      %p381 = scmp.le.s32.totalorder 1, %s26
      %p382 = scmp.lt.s32.totalorder %s26, 3
      %p383 = pnand %p381, %p382
      %p384 = pneg %p383
      // Predicated region
      $region57: #{tpu_custom_call.1} parent=5 // pred_check
        _
      $region58: #{tpu_custom_call.1} parent=5 // pred_check_branch
        %386 = sbr.rel (%p383) target = $region60
      $region59: #{tpu_custom_call.1} parent=5 // pred_region
        %s387 = ssub.s32 %s26, 1
        %s388 = sand.u32 %s39, 1
        %s389 = scalar_lea.sflag [#allocation3], %s388
        %s390 = sand.u32 %s39, 1
        %s391 = smul.addr %s390, 8
        %s392 = scalar_lea.vmem [#allocation2], %s391
        // Predicated region
        $region61: #{tpu_custom_call.1} parent=59 // pred_check
          %p393 = pneg %p52
        $region62: #{tpu_custom_call.1} parent=59 // pred_check_branch
          %395 = sbr.rel (%p393) target = $region64
        $region63: #{tpu_custom_call.1} parent=59 // pred_region
          %396 = dma.done %s389, 128
        $region64: #{tpu_custom_call.1} parent=59 // pred_fallthru
          _
        %s397 = sand.u32 %s31, 1
        %s398 = scalar_lea.sflag [#allocation6], %s397
        %s399 = sand.u32 %s65, 1
        %s400 = smul.addr %s399, 8
        %s401 = scalar_lea.vmem [#allocation5], %s400
        // Predicated region
        $region65: #{tpu_custom_call.1} parent=59 // pred_check
          %p402 = pneg %p78
        $region66: #{tpu_custom_call.1} parent=59 // pred_check_branch
          %404 = sbr.rel (%p402) target = $region68
        $region67: #{tpu_custom_call.1} parent=59 // pred_region
          %405 = dma.done %s398, 128
        $region68: #{tpu_custom_call.1} parent=59 // pred_fallthru
          _
        // Predicated region
        $region69: #{tpu_custom_call.1} parent=59 // pred_check
          %p406 = pneg %p141
        $region70: #{tpu_custom_call.1} parent=59 // pred_check_branch
          %408 = sbr.rel (%p406) target = $region72
        $region71: #{tpu_custom_call.1} parent=59 // pred_region
          %409 = dma.done [#allocation6], 512
        $region72: #{tpu_custom_call.1} parent=59 // pred_fallthru
          _
        // Predicated region
        $region73: #{tpu_custom_call.1} parent=59 // pred_check
          %p410 = pneg %p183
        $region74: #{tpu_custom_call.1} parent=59 // pred_check_branch
          %412 = sbr.rel (%p410) target = $region76
        $region75: #{tpu_custom_call.1} parent=59 // pred_region
          %413 = dma.done [#allocation9], 512
        $region76: #{tpu_custom_call.1} parent=59 // pred_fallthru
          _
        // Predicated region
        $region77: #{tpu_custom_call.1} parent=59 // pred_check
          %p414 = pneg %p225
        $region78: #{tpu_custom_call.1} parent=59 // pred_check_branch
          %416 = sbr.rel (%p414) target = $region80
        $region79: #{tpu_custom_call.1} parent=59 // pred_region
          %417 = dma.done [#allocation9], 512
        $region80: #{tpu_custom_call.1} parent=59 // pred_fallthru
          _
        %s418 = sand.u32 %s39, 1
        %s419 = scalar_lea.sflag [#allocation3], %s418
        %s420 = sand.u32 %s39, 1
        %s421 = smul.addr %s420, 8
        %s422 = scalar_lea.vmem [#allocation2], %s421
        %p423 = pneg %p52
        %p424 = pneg %p49
        %s425 = sand.u32 %s31, 1
        %s426 = scalar_lea.sflag [#allocation6], %s425
        %s427 = sand.u32 %s65, 1
        %s428 = smul.addr %s427, 8
        %s429 = scalar_lea.vmem [#allocation5], %s428
        %p430 = pneg %p78
        %p431 = pneg %p75
        %p432 = pneg %p99
        %p433 = pneg %p96
        %p434 = pneg %p120
        %p435 = pneg %p117
        %p436 = pneg %p141
        %p437 = pneg %p138
        %p438 = pneg %p162
        %p439 = pneg %p159
        %p440 = pneg %p183
        %p441 = pneg %p180
        %p442 = pneg %p204
        %p443 = pneg %p201
        %p444 = pneg %p225
        %p445 = pneg %p222
        %p446 = pneg %p246
        %p447 = pneg %p243
        %p448 = pneg %p272
        %p449 = pneg %p269
        %s450 = sand.u32 %s259, 1
        %s451 = scalar_lea.sflag [#allocation4], %s450
        %s452 = sand.u32 %s259, 1
        %s453 = smul.addr %s452, 8
        %s454 = scalar_lea.vmem [#allocation11], %s453
        %v455 = vld [vmem:[%s392] sm:$0xff]
        %vm456 = vcmask 261120
        %v457 = vsel %vm456, %v455, 0.0
        %458 = vadd.xlane.f32.xlu0 %v457
        %v459 = vpop.xlane.xlu0 %458
        %v460 = vrcp.pop 32.0
        %v461 = vmul.f32 %v459, %v460
        %v462 = vsub.f32 %v455, %v461
        %v463 = vmul.f32 %v462, %v462
        %v464 = vsel %vm456, %v463, 0.0
        %465 = vadd.xlane.f32.xlu0 %v464
        %v466 = vpop.xlane.xlu0 %465
        %v467 = vmul.f32 %v466, 0.032258064
        %v468 = vrsqrt.pop %v467
        %v469 = vmul.f32 %v467, %v468
        %vm470 = vcmp.eq.f32.partialorder %v467, inf
        %v471 = vsel %vm470, %v467, %v469
        %vm472 = vcmp.eq.f32.partialorder %v467, 0.0
        %v473 = vand.u32 %v467, 2147483648
        %v474 = vsel %vm472, %v473, %v471
        %v475 = vadd.f32 %v474, 1e-06
        %v476 = vrcp.pop %v475
        %v477 = vld [vmem:[%s2] sm:$0x1]
        %v479 = vlaneseq
        %v480 = vshrl.u32 %v479, 7
        %v481 = vsub.s32 0, %v480
        %v482 = vrot.slane %v477, %v481
        %v484 = vmul.f32 %v482, %v462
        %v485 = vmul.f32 %v484, %v476
        %v486 = vld [vmem:[%s3] sm:$0x1]
        %v488 = vlaneseq
        %v489 = vshrl.u32 %v488, 7
        %v490 = vsub.s32 0, %v489
        %v491 = vrot.slane %v486, %v490
        %v493 = vadd.f32 %v485, %v491
        %v494 = vld [vmem:[#allocation7] sm:$0xff]
        %v495 = vld [vmem:[#allocation7 + $0x8] sm:$0xff]
        %v496 = vld [vmem:[#allocation7 + $0x10] sm:$0xff]
        %v497 = vld [vmem:[#allocation7 + $0x18] sm:$0xff]
        %v498 = vld [vmem:[%s5] sm:$0x1]
        %v500 = vlaneseq
        %v501 = vshrl.u32 %v500, 7
        %v502 = vsub.s32 0, %v501
        %v503 = vrot.slane %v498, %v502
        %v506 = vsel %vm456, %v493, 0
        %508 = vmatprep.subr.mxu0 0.0
        %509 = vmatpush1.msra.mxu0 %v494
        %510 = vmatprep.subr.mxu0 0.0
        %511 = vmatpush1.msra.mxu0 %v495
        %512 = vmatprep.subr.mxu0 0.0
        %513 = vmatpush1.msra.mxu0 %v496
        %514 = vmatprep.subr.mxu0 0.0
        %515 = vmatpush1.msra.mxu0 %v497
        %516 = vmatprep.subr.mxu0 0.0
        %517 = vmatpush1.msra.mxu0 0.0
        %518 = vmatprep.subr.mxu0 0.0
        %519 = vmatpush1.msra.mxu0 0.0
        %520 = vmatprep.subr.mxu0 0.0
        %521 = vmatpush1.msra.mxu0 0.0
        %522 = vmatprep.subr.mxu0 0.0
        %523 = vmatpush1.msra.mxu0 0.0
        %524 = vmatprep.subr.mxu0 0.0
        %525 = vmatpush1.msra.mxu0 0.0
        %526 = vmatprep.subr.mxu0 0.0
        %527 = vmatpush1.msra.mxu0 0.0
        %528 = vmatprep.subr.mxu0 0.0
        %529 = vmatpush1.msra.mxu0 0.0
        %530 = vmatprep.subr.mxu0 0.0
        %531 = vmatpush1.msra.mxu0 0.0
        %532 = vmatprep.subr.mxu0 0.0
        %533 = vmatpush1.msra.mxu0 0.0
        %534 = vmatprep.subr.mxu0 0.0
        %535 = vmatpush1.msra.mxu0 0.0
        %536 = vmatprep.subr.mxu0 0.0
        %537 = vmatpush1.msra.mxu0 0.0
        %538 = vmatprep.subr.mxu0 0.0
        %539 = vmatpush1.msra.mxu0 0.0
        %540 = vmatprep.subr.mxu0 0.0
        %541 = vmatpush1.msra.mxu0 0.0
        %542 = vmatprep.subr.mxu0 0.0
        %543 = vmatpush1.msra.mxu0 0.0
        %544 = vmatprep.subr.mxu0 0.0
        %545 = vmatpush1.msra.mxu0 0.0
        %546 = vmatprep.subr.mxu0 0.0
        %547 = vmatpush1.msra.mxu0 0.0
        %548 = vmatprep.subr.mxu0 0.0
        %549 = vmatpush1.msra.mxu0 0.0
        %550 = vmatprep.subr.mxu0 0.0
        %551 = vmatpush1.msra.mxu0 0.0
        %552 = vmatprep.subr.mxu0 0.0
        %553 = vmatpush1.msra.mxu0 0.0
        %554 = vmatprep.subr.mxu0 0.0
        %555 = vmatpush1.msra.mxu0 0.0
        %556 = vmatprep.subr.mxu0 0.0
        %557 = vmatpush1.msra.mxu0 0.0
        %558 = vmatprep.subr.mxu0 0.0
        %559 = vmatpush1.msra.mxu0 0.0
        %560 = vmatprep.subr.mxu0 0.0
        %561 = vmatpush1.msra.mxu0 0.0
        %562 = vmatprep.subr.mxu0 0.0
        %563 = vmatpush1.msra.mxu0 0.0
        %564 = vmatprep.subr.mxu0 0.0
        %565 = vmatpush1.msra.mxu0 0.0
        %566 = vmatprep.subr.mxu0 0.0
        %567 = vmatpush1.msra.mxu0 0.0
        %568 = vmatprep.subr.mxu0 0.0
        %569 = vmatpush1.msra.mxu0 0.0
        %570 = vmatprep.subr.mxu0 0.0
        %571 = vmatpush1.msra.mxu0 0.0
        %572 = vmatprep.mubr.f32.mxu0 0.0
        %573 = vmatmul.mubr.f32.gmra.mrb[0].mxu0 %v506
        %v574 = vpop.f32.mrb[0].mxu0
        %v575 = vadd.f32 %v503, %v574
        %v576 = vpop.f32.mrb[0].mxu0
        %577 = vdwg.mxu0
        %v578 = vld [vmem:[#allocation8] sm:$0xff]
        %v579 = vld [vmem:[#allocation8 + $0x8] sm:$0xff]
        %v580 = vld [vmem:[#allocation8 + $0x10] sm:$0xff]
        %v581 = vld [vmem:[#allocation8 + $0x18] sm:$0xff]
        %v582 = vld [vmem:[%s7] sm:$0x1]
        %v584 = vlaneseq
        %v585 = vshrl.u32 %v584, 7
        %v586 = vsub.s32 0, %v585
        %v587 = vrot.slane %v582, %v586
        %v590 = vsel %vm456, %v455, 0
        %592 = vmatprep.subr.mxu0 0.0
        %593 = vmatpush1.msra.mxu0 %v578
        %594 = vmatprep.subr.mxu0 0.0
        %595 = vmatpush1.msra.mxu0 %v579
        %596 = vmatprep.subr.mxu0 0.0
        %597 = vmatpush1.msra.mxu0 %v580
        %598 = vmatprep.subr.mxu0 0.0
        %599 = vmatpush1.msra.mxu0 %v581
        %600 = vmatprep.subr.mxu0 0.0
        %601 = vmatpush1.msra.mxu0 0.0
        %602 = vmatprep.subr.mxu0 0.0
        %603 = vmatpush1.msra.mxu0 0.0
        %604 = vmatprep.subr.mxu0 0.0
        %605 = vmatpush1.msra.mxu0 0.0
        %606 = vmatprep.subr.mxu0 0.0
        %607 = vmatpush1.msra.mxu0 0.0
        %608 = vmatprep.subr.mxu0 0.0
        %609 = vmatpush1.msra.mxu0 0.0
        %610 = vmatprep.subr.mxu0 0.0
        %611 = vmatpush1.msra.mxu0 0.0
        %612 = vmatprep.subr.mxu0 0.0
        %613 = vmatpush1.msra.mxu0 0.0
        %614 = vmatprep.subr.mxu0 0.0
        %615 = vmatpush1.msra.mxu0 0.0
        %616 = vmatprep.subr.mxu0 0.0
        %617 = vmatpush1.msra.mxu0 0.0
        %618 = vmatprep.subr.mxu0 0.0
        %619 = vmatpush1.msra.mxu0 0.0
        %620 = vmatprep.subr.mxu0 0.0
        %621 = vmatpush1.msra.mxu0 0.0
        %622 = vmatprep.subr.mxu0 0.0
        %623 = vmatpush1.msra.mxu0 0.0
        %624 = vmatprep.subr.mxu0 0.0
        %625 = vmatpush1.msra.mxu0 0.0
        %626 = vmatprep.subr.mxu0 0.0
        %627 = vmatpush1.msra.mxu0 0.0
        %628 = vmatprep.subr.mxu0 0.0
        %629 = vmatpush1.msra.mxu0 0.0
        %630 = vmatprep.subr.mxu0 0.0
        %631 = vmatpush1.msra.mxu0 0.0
        %632 = vmatprep.subr.mxu0 0.0
        %633 = vmatpush1.msra.mxu0 0.0
        %634 = vmatprep.subr.mxu0 0.0
        %635 = vmatpush1.msra.mxu0 0.0
        %636 = vmatprep.subr.mxu0 0.0
        %637 = vmatpush1.msra.mxu0 0.0
        %638 = vmatprep.subr.mxu0 0.0
        %639 = vmatpush1.msra.mxu0 0.0
        %640 = vmatprep.subr.mxu0 0.0
        %641 = vmatpush1.msra.mxu0 0.0
        %642 = vmatprep.subr.mxu0 0.0
        %643 = vmatpush1.msra.mxu0 0.0
        %644 = vmatprep.subr.mxu0 0.0
        %645 = vmatpush1.msra.mxu0 0.0
        %646 = vmatprep.subr.mxu0 0.0
        %647 = vmatpush1.msra.mxu0 0.0
        %648 = vmatprep.subr.mxu0 0.0
        %649 = vmatpush1.msra.mxu0 0.0
        %650 = vmatprep.subr.mxu0 0.0
        %651 = vmatpush1.msra.mxu0 0.0
        %652 = vmatprep.subr.mxu0 0.0
        %653 = vmatpush1.msra.mxu0 0.0
        %654 = vmatprep.subr.mxu0 0.0
        %655 = vmatpush1.msra.mxu0 0.0
        %656 = vmatprep.mubr.f32.mxu0 0.0
        %657 = vmatmul.mubr.f32.gmra.mrb[0].mxu0 %v590
        %v658 = vpop.f32.mrb[0].mxu0
        %v659 = vadd.f32 %v587, %v658
        %v660 = vpop.f32.mrb[0].mxu0
        %661 = vdwg.mxu0
        %663 = vrot.lane.b32.xlu0 %v575, 120
        %v664 = vpop.permute.xlu0 %663
        %666 = vrot.lane.b32.xlu0 %v575, 112
        %v667 = vpop.permute.xlu0 %666
        %669 = vrot.lane.b32.xlu0 %v575, 104
        %v670 = vpop.permute.xlu0 %669
        %v672 = vcombine.low %v575, %v667
        %v673 = vcombine.high %v575, %v667
        %v675 = vunpack.c.l.s4 1983009808
        %v676 = vunpack.c.0.s8 %v675
        %v677 = vlaneseq
        %v678 = vshrl.u32 %v677, 7
        %v679 = vsub.s32 %v676, %v678
        %v680 = vrot.slane %v672, %v679
        %v682 = vunpack.c.l.s4 1983009808
        %v683 = vunpack.c.0.s8 %v682
        %v684 = vlaneseq
        %v685 = vshrl.u32 %v684, 7
        %v686 = vsub.s32 %v683, %v685
        %v687 = vrot.slane %v673, %v686
        %v688 = vcombine.low %v664, %v670
        %v689 = vcombine.high %v664, %v670
        %v691 = vunpack.c.l.s4 1983009808
        %v692 = vunpack.c.0.s8 %v691
        %v693 = vlaneseq
        %v694 = vshrl.u32 %v693, 7
        %v695 = vsub.s32 %v692, %v694
        %v696 = vrot.slane %v688, %v695
        %v698 = vunpack.c.l.s4 1983009808
        %v699 = vunpack.c.0.s8 %v698
        %v700 = vlaneseq
        %v701 = vshrl.u32 %v700, 7
        %v702 = vsub.s32 %v699, %v701
        %v703 = vrot.slane %v689, %v702
        %v704 = vcombine.low %v680, %v696
        %v705 = vcombine.high %v680, %v696
        %v707 = vunpack.c.l.s4 1934713408
        %v708 = vunpack.c.0.s8 %v707
        %v709 = vlaneseq
        %v710 = vshrl.u32 %v709, 7
        %v711 = vsub.s32 %v708, %v710
        %v712 = vrot.slane %v704, %v711
        %v714 = vunpack.c.l.s4 1934713408
        %v715 = vunpack.c.0.s8 %v714
        %v716 = vlaneseq
        %v717 = vshrl.u32 %v716, 7
        %v718 = vsub.s32 %v715, %v717
        %v719 = vrot.slane %v705, %v718
        %v720 = vcombine.low %v687, %v703
        %v721 = vcombine.high %v687, %v703
        %v723 = vunpack.c.l.s4 1934713408
        %v724 = vunpack.c.0.s8 %v723
        %v725 = vlaneseq
        %v726 = vshrl.u32 %v725, 7
        %v727 = vsub.s32 %v724, %v726
        %v728 = vrot.slane %v720, %v727
        %v730 = vunpack.c.l.s4 1934713408
        %v731 = vunpack.c.0.s8 %v730
        %v732 = vlaneseq
        %v733 = vshrl.u32 %v732, 7
        %v734 = vsub.s32 %v731, %v733
        %v735 = vrot.slane %v721, %v734
        %v736 = vcombine.high %v712, 0.0
        %v737 = vcombine.high %v719, 0.0
        %v738 = vcombine.high %v728, 0.0
        %v739 = vcombine.high %v735, 0.0
        %v740 = vcombine.low %v712, %v719
        %v742 = vunpack.c.l.s4 1983009808
        %v743 = vunpack.c.0.s8 %v742
        %v744 = vlaneseq
        %v745 = vshrl.u32 %v744, 7
        %v746 = vsub.s32 %v743, %v745
        %v747 = vrot.slane %v740, %v746
        %v748 = vcombine.low %v736, %v737
        %v750 = vunpack.c.l.s4 1983009808
        %v751 = vunpack.c.0.s8 %v750
        %v752 = vlaneseq
        %v753 = vshrl.u32 %v752, 7
        %v754 = vsub.s32 %v751, %v753
        %v755 = vrot.slane %v748, %v754
        %v756 = vcombine.low %v728, %v735
        %v758 = vunpack.c.l.s4 1983009808
        %v759 = vunpack.c.0.s8 %v758
        %v760 = vlaneseq
        %v761 = vshrl.u32 %v760, 7
        %v762 = vsub.s32 %v759, %v761
        %v763 = vrot.slane %v756, %v762
        %v764 = vcombine.low %v738, %v739
        %v766 = vunpack.c.l.s4 1983009808
        %v767 = vunpack.c.0.s8 %v766
        %v768 = vlaneseq
        %v769 = vshrl.u32 %v768, 7
        %v770 = vsub.s32 %v767, %v769
        %v771 = vrot.slane %v764, %v770
        %v772 = vcombine.low %v747, %v755
        %v773 = vcombine.high %v747, %v755
        %v775 = vunpack.c.l.s4 1934713408
        %v776 = vunpack.c.0.s8 %v775
        %v777 = vlaneseq
        %v778 = vshrl.u32 %v777, 7
        %v779 = vsub.s32 %v776, %v778
        %v780 = vrot.slane %v772, %v779
        %v782 = vunpack.c.l.s4 1934713408
        %v783 = vunpack.c.0.s8 %v782
        %v784 = vlaneseq
        %v785 = vshrl.u32 %v784, 7
        %v786 = vsub.s32 %v783, %v785
        %v787 = vrot.slane %v773, %v786
        %v788 = vcombine.low %v763, %v771
        %v789 = vcombine.high %v763, %v771
        %v791 = vunpack.c.l.s4 1934713408
        %v792 = vunpack.c.0.s8 %v791
        %v793 = vlaneseq
        %v794 = vshrl.u32 %v793, 7
        %v795 = vsub.s32 %v792, %v794
        %v796 = vrot.slane %v788, %v795
        %v798 = vunpack.c.l.s4 1934713408
        %v799 = vunpack.c.0.s8 %v798
        %v800 = vlaneseq
        %v801 = vshrl.u32 %v800, 7
        %v802 = vsub.s32 %v799, %v801
        %v803 = vrot.slane %v789, %v802
        %v804 = vcombine.low %v780, %v796
        %v805 = vcombine.high %v780, %v796
        %v806 = vcombine.low %v787, %v803
        %v807 = vcombine.high %v787, %v803
        %809 = vrot.lane.b32.xlu0 %v659, 120
        %v810 = vpop.permute.xlu0 %809
        %812 = vrot.lane.b32.xlu0 %v659, 112
        %v813 = vpop.permute.xlu0 %812
        %815 = vrot.lane.b32.xlu0 %v659, 104
        %v816 = vpop.permute.xlu0 %815
        %v818 = vcombine.low %v659, %v813
        %v819 = vcombine.high %v659, %v813
        %v821 = vunpack.c.l.s4 1983009808
        %v822 = vunpack.c.0.s8 %v821
        %v823 = vlaneseq
        %v824 = vshrl.u32 %v823, 7
        %v825 = vsub.s32 %v822, %v824
        %v826 = vrot.slane %v818, %v825
        %v828 = vunpack.c.l.s4 1983009808
        %v829 = vunpack.c.0.s8 %v828
        %v830 = vlaneseq
        %v831 = vshrl.u32 %v830, 7
        %v832 = vsub.s32 %v829, %v831
        %v833 = vrot.slane %v819, %v832
        %v834 = vcombine.low %v810, %v816
        %v835 = vcombine.high %v810, %v816
        %v837 = vunpack.c.l.s4 1983009808
        %v838 = vunpack.c.0.s8 %v837
        %v839 = vlaneseq
        %v840 = vshrl.u32 %v839, 7
        %v841 = vsub.s32 %v838, %v840
        %v842 = vrot.slane %v834, %v841
        %v844 = vunpack.c.l.s4 1983009808
        %v845 = vunpack.c.0.s8 %v844
        %v846 = vlaneseq
        %v847 = vshrl.u32 %v846, 7
        %v848 = vsub.s32 %v845, %v847
        %v849 = vrot.slane %v835, %v848
        %v850 = vcombine.low %v826, %v842
        %v851 = vcombine.high %v826, %v842
        %v853 = vunpack.c.l.s4 1934713408
        %v854 = vunpack.c.0.s8 %v853
        %v855 = vlaneseq
        %v856 = vshrl.u32 %v855, 7
        %v857 = vsub.s32 %v854, %v856
        %v858 = vrot.slane %v850, %v857
        %v860 = vunpack.c.l.s4 1934713408
        %v861 = vunpack.c.0.s8 %v860
        %v862 = vlaneseq
        %v863 = vshrl.u32 %v862, 7
        %v864 = vsub.s32 %v861, %v863
        %v865 = vrot.slane %v851, %v864
        %v866 = vcombine.low %v833, %v849
        %v867 = vcombine.high %v833, %v849
        %v869 = vunpack.c.l.s4 1934713408
        %v870 = vunpack.c.0.s8 %v869
        %v871 = vlaneseq
        %v872 = vshrl.u32 %v871, 7
        %v873 = vsub.s32 %v870, %v872
        %v874 = vrot.slane %v866, %v873
        %v876 = vunpack.c.l.s4 1934713408
        %v877 = vunpack.c.0.s8 %v876
        %v878 = vlaneseq
        %v879 = vshrl.u32 %v878, 7
        %v880 = vsub.s32 %v877, %v879
        %v881 = vrot.slane %v867, %v880
        %v882 = vcombine.high %v858, 0.0
        %v883 = vcombine.high %v865, 0.0
        %v884 = vcombine.high %v874, 0.0
        %v885 = vcombine.high %v881, 0.0
        %v886 = vcombine.low %v858, %v865
        %v888 = vunpack.c.l.s4 1983009808
        %v889 = vunpack.c.0.s8 %v888
        %v890 = vlaneseq
        %v891 = vshrl.u32 %v890, 7
        %v892 = vsub.s32 %v889, %v891
        %v893 = vrot.slane %v886, %v892
        %v894 = vcombine.low %v882, %v883
        %v896 = vunpack.c.l.s4 1983009808
        %v897 = vunpack.c.0.s8 %v896
        %v898 = vlaneseq
        %v899 = vshrl.u32 %v898, 7
        %v900 = vsub.s32 %v897, %v899
        %v901 = vrot.slane %v894, %v900
        %v902 = vcombine.low %v874, %v881
        %v904 = vunpack.c.l.s4 1983009808
        %v905 = vunpack.c.0.s8 %v904
        %v906 = vlaneseq
        %v907 = vshrl.u32 %v906, 7
        %v908 = vsub.s32 %v905, %v907
        %v909 = vrot.slane %v902, %v908
        %v910 = vcombine.low %v884, %v885
        %v912 = vunpack.c.l.s4 1983009808
        %v913 = vunpack.c.0.s8 %v912
        %v914 = vlaneseq
        %v915 = vshrl.u32 %v914, 7
        %v916 = vsub.s32 %v913, %v915
        %v917 = vrot.slane %v910, %v916
        %v918 = vcombine.low %v893, %v901
        %v919 = vcombine.high %v893, %v901
        %v921 = vunpack.c.l.s4 1934713408
        %v922 = vunpack.c.0.s8 %v921
        %v923 = vlaneseq
        %v924 = vshrl.u32 %v923, 7
        %v925 = vsub.s32 %v922, %v924
        %v926 = vrot.slane %v918, %v925
        %v928 = vunpack.c.l.s4 1934713408
        %v929 = vunpack.c.0.s8 %v928
        %v930 = vlaneseq
        %v931 = vshrl.u32 %v930, 7
        %v932 = vsub.s32 %v929, %v931
        %v933 = vrot.slane %v919, %v932
        %v934 = vcombine.low %v909, %v917
        %v935 = vcombine.high %v909, %v917
        %v937 = vunpack.c.l.s4 1934713408
        %v938 = vunpack.c.0.s8 %v937
        %v939 = vlaneseq
        %v940 = vshrl.u32 %v939, 7
        %v941 = vsub.s32 %v938, %v940
        %v942 = vrot.slane %v934, %v941
        %v944 = vunpack.c.l.s4 1934713408
        %v945 = vunpack.c.0.s8 %v944
        %v946 = vlaneseq
        %v947 = vshrl.u32 %v946, 7
        %v948 = vsub.s32 %v945, %v947
        %v949 = vrot.slane %v935, %v948
        %v950 = vcombine.low %v926, %v942
        %v951 = vcombine.high %v926, %v942
        %v952 = vcombine.low %v933, %v949
        %v953 = vcombine.high %v933, %v949
        %954 = vrot.lane.b32.xlu0 %v659, 96
        %v955 = vpop.permute.xlu0 %954
        %956 = vrot.lane.b32.xlu0 %v810, 96
        %v957 = vpop.permute.xlu0 %956
        %958 = vrot.lane.b32.xlu0 %v813, 96
        %v959 = vpop.permute.xlu0 %958
        %960 = vrot.lane.b32.xlu0 %v816, 96
        %v961 = vpop.permute.xlu0 %960
        %v966 = vcombine.low %v955, %v959
        %v967 = vcombine.high %v955, %v959
        %v969 = vunpack.c.l.s4 1983009808
        %v970 = vunpack.c.0.s8 %v969
        %v971 = vlaneseq
        %v972 = vshrl.u32 %v971, 7
        %v973 = vsub.s32 %v970, %v972
        %v974 = vrot.slane %v966, %v973
        %v976 = vunpack.c.l.s4 1983009808
        %v977 = vunpack.c.0.s8 %v976
        %v978 = vlaneseq
        %v979 = vshrl.u32 %v978, 7
        %v980 = vsub.s32 %v977, %v979
        %v981 = vrot.slane %v967, %v980
        %v982 = vcombine.low %v957, %v961
        %v983 = vcombine.high %v957, %v961
        %v985 = vunpack.c.l.s4 1983009808
        %v986 = vunpack.c.0.s8 %v985
        %v987 = vlaneseq
        %v988 = vshrl.u32 %v987, 7
        %v989 = vsub.s32 %v986, %v988
        %v990 = vrot.slane %v982, %v989
        %v992 = vunpack.c.l.s4 1983009808
        %v993 = vunpack.c.0.s8 %v992
        %v994 = vlaneseq
        %v995 = vshrl.u32 %v994, 7
        %v996 = vsub.s32 %v993, %v995
        %v997 = vrot.slane %v983, %v996
        %v998 = vcombine.low %v974, %v990
        %v999 = vcombine.high %v974, %v990
        %v1001 = vunpack.c.l.s4 1934713408
        %v1002 = vunpack.c.0.s8 %v1001
        %v1003 = vlaneseq
        %v1004 = vshrl.u32 %v1003, 7
        %v1005 = vsub.s32 %v1002, %v1004
        %v1006 = vrot.slane %v998, %v1005
        %v1008 = vunpack.c.l.s4 1934713408
        %v1009 = vunpack.c.0.s8 %v1008
        %v1010 = vlaneseq
        %v1011 = vshrl.u32 %v1010, 7
        %v1012 = vsub.s32 %v1009, %v1011
        %v1013 = vrot.slane %v999, %v1012
        %v1014 = vcombine.low %v981, %v997
        %v1015 = vcombine.high %v981, %v997
        %v1017 = vunpack.c.l.s4 1934713408
        %v1018 = vunpack.c.0.s8 %v1017
        %v1019 = vlaneseq
        %v1020 = vshrl.u32 %v1019, 7
        %v1021 = vsub.s32 %v1018, %v1020
        %v1022 = vrot.slane %v1014, %v1021
        %v1024 = vunpack.c.l.s4 1934713408
        %v1025 = vunpack.c.0.s8 %v1024
        %v1026 = vlaneseq
        %v1027 = vshrl.u32 %v1026, 7
        %v1028 = vsub.s32 %v1025, %v1027
        %v1029 = vrot.slane %v1015, %v1028
        %v1030 = vcombine.high %v1006, 0.0
        %v1031 = vcombine.high %v1013, 0.0
        %v1032 = vcombine.high %v1022, 0.0
        %v1033 = vcombine.high %v1029, 0.0
        %v1034 = vcombine.low %v1006, %v1013
        %v1036 = vunpack.c.l.s4 1983009808
        %v1037 = vunpack.c.0.s8 %v1036
        %v1038 = vlaneseq
        %v1039 = vshrl.u32 %v1038, 7
        %v1040 = vsub.s32 %v1037, %v1039
        %v1041 = vrot.slane %v1034, %v1040
        %v1042 = vcombine.low %v1030, %v1031
        %v1044 = vunpack.c.l.s4 1983009808
        %v1045 = vunpack.c.0.s8 %v1044
        %v1046 = vlaneseq
        %v1047 = vshrl.u32 %v1046, 7
        %v1048 = vsub.s32 %v1045, %v1047
        %v1049 = vrot.slane %v1042, %v1048
        %v1050 = vcombine.low %v1022, %v1029
        %v1052 = vunpack.c.l.s4 1983009808
        %v1053 = vunpack.c.0.s8 %v1052
        %v1054 = vlaneseq
        %v1055 = vshrl.u32 %v1054, 7
        %v1056 = vsub.s32 %v1053, %v1055
        %v1057 = vrot.slane %v1050, %v1056
        %v1058 = vcombine.low %v1032, %v1033
        %v1060 = vunpack.c.l.s4 1983009808
        %v1061 = vunpack.c.0.s8 %v1060
        %v1062 = vlaneseq
        %v1063 = vshrl.u32 %v1062, 7
        %v1064 = vsub.s32 %v1061, %v1063
        %v1065 = vrot.slane %v1058, %v1064
        %v1066 = vcombine.low %v1041, %v1049
        %v1067 = vcombine.high %v1041, %v1049
        %v1069 = vunpack.c.l.s4 1934713408
        %v1070 = vunpack.c.0.s8 %v1069
        %v1071 = vlaneseq
        %v1072 = vshrl.u32 %v1071, 7
        %v1073 = vsub.s32 %v1070, %v1072
        %v1074 = vrot.slane %v1066, %v1073
        %v1076 = vunpack.c.l.s4 1934713408
        %v1077 = vunpack.c.0.s8 %v1076
        %v1078 = vlaneseq
        %v1079 = vshrl.u32 %v1078, 7
        %v1080 = vsub.s32 %v1077, %v1079
        %v1081 = vrot.slane %v1067, %v1080
        %v1082 = vcombine.low %v1057, %v1065
        %v1083 = vcombine.high %v1057, %v1065
        %v1085 = vunpack.c.l.s4 1934713408
        %v1086 = vunpack.c.0.s8 %v1085
        %v1087 = vlaneseq
        %v1088 = vshrl.u32 %v1087, 7
        %v1089 = vsub.s32 %v1086, %v1088
        %v1090 = vrot.slane %v1082, %v1089
        %v1092 = vunpack.c.l.s4 1934713408
        %v1093 = vunpack.c.0.s8 %v1092
        %v1094 = vlaneseq
        %v1095 = vshrl.u32 %v1094, 7
        %v1096 = vsub.s32 %v1093, %v1095
        %v1097 = vrot.slane %v1083, %v1096
        %v1098 = vcombine.low %v1074, %v1090
        %v1099 = vcombine.high %v1074, %v1090
        %v1100 = vcombine.low %v1081, %v1097
        %v1101 = vcombine.high %v1081, %v1097
        %vm1102 = vcmask 64512
        %v1104 = vsel %vm1102, %v804, 0
        %v1107 = vsel %vm1102, %v950, 0
        %1109 = vmatprep.subr.mxu0 0.0
        %1110 = vmatpush1.xpose.msra.mxu0 %v1107
        %1111 = vmatprep.subr.mxu0 0.0
        %1112 = vmatpush1.xpose.msra.mxu0 0.0
        %1113 = vmatprep.subr.mxu0 0.0
        %1114 = vmatpush1.xpose.msra.mxu0 0.0
        %1115 = vmatprep.subr.mxu0 0.0
        %1116 = vmatpush1.xpose.msra.mxu0 0.0
        %1117 = vmatprep.subr.mxu0 0.0
        %1118 = vmatpush1.xpose.msra.mxu0 0.0
        %1119 = vmatprep.subr.mxu0 0.0
        %1120 = vmatpush1.xpose.msra.mxu0 0.0
        %1121 = vmatprep.subr.mxu0 0.0
        %1122 = vmatpush1.xpose.msra.mxu0 0.0
        %1123 = vmatprep.subr.mxu0 0.0
        %1124 = vmatpush1.xpose.msra.mxu0 0.0
        %1125 = vmatprep.subr.mxu0 0.0
        %1126 = vmatpush1.xpose.msra.mxu0 0.0
        %1127 = vmatprep.subr.mxu0 0.0
        %1128 = vmatpush1.xpose.msra.mxu0 0.0
        %1129 = vmatprep.subr.mxu0 0.0
        %1130 = vmatpush1.xpose.msra.mxu0 0.0
        %1131 = vmatprep.subr.mxu0 0.0
        %1132 = vmatpush1.xpose.msra.mxu0 0.0
        %1133 = vmatprep.subr.mxu0 0.0
        %1134 = vmatpush1.xpose.msra.mxu0 0.0
        %1135 = vmatprep.subr.mxu0 0.0
        %1136 = vmatpush1.xpose.msra.mxu0 0.0
        %1137 = vmatprep.subr.mxu0 0.0
        %1138 = vmatpush1.xpose.msra.mxu0 0.0
        %1139 = vmatprep.subr.mxu0 0.0
        %1140 = vmatpush1.xpose.msra.mxu0 0.0
        %1141 = vmatprep.subr.mxu0 0.0
        %1142 = vmatpush1.xpose.msra.mxu0 0.0
        %1143 = vmatprep.subr.mxu0 0.0
        %1144 = vmatpush1.xpose.msra.mxu0 0.0
        %1145 = vmatprep.subr.mxu0 0.0
        %1146 = vmatpush1.xpose.msra.mxu0 0.0
        %1147 = vmatprep.subr.mxu0 0.0
        %1148 = vmatpush1.xpose.msra.mxu0 0.0
        %1149 = vmatprep.subr.mxu0 0.0
        %1150 = vmatpush1.xpose.msra.mxu0 0.0
        %1151 = vmatprep.subr.mxu0 0.0
        %1152 = vmatpush1.xpose.msra.mxu0 0.0
        %1153 = vmatprep.subr.mxu0 0.0
        %1154 = vmatpush1.xpose.msra.mxu0 0.0
        %1155 = vmatprep.subr.mxu0 0.0
        %1156 = vmatpush1.xpose.msra.mxu0 0.0
        %1157 = vmatprep.subr.mxu0 0.0
        %1158 = vmatpush1.xpose.msra.mxu0 0.0
        %1159 = vmatprep.subr.mxu0 0.0
        %1160 = vmatpush1.xpose.msra.mxu0 0.0
        %1161 = vmatprep.subr.mxu0 0.0
        %1162 = vmatpush1.xpose.msra.mxu0 0.0
        %1163 = vmatprep.subr.mxu0 0.0
        %1164 = vmatpush1.xpose.msra.mxu0 0.0
        %1165 = vmatprep.subr.mxu0 0.0
        %1166 = vmatpush1.xpose.msra.mxu0 0.0
        %1167 = vmatprep.subr.mxu0 0.0
        %1168 = vmatpush1.xpose.msra.mxu0 0.0
        %1169 = vmatprep.subr.mxu0 0.0
        %1170 = vmatpush1.xpose.msra.mxu0 0.0
        %1171 = vmatprep.subr.mxu0 0.0
        %1172 = vmatpush1.xpose.msra.mxu0 0.0
        %1173 = vmatprep.mubr.f32.mxu0 0.0
        %1174 = vmatmul.mubr.f32.gmra.mrb[0].mxu0 %v1104
        %v1175 = vpop.f32.mrb[0].mxu0
        %v1176 = vadd.f32 0.0, %v1175
        %v1177 = vpop.f32.mrb[0].mxu0
        %1178 = vdwg.mxu0
        %v1180 = vsel %vm1102, %v805, 0
        %v1183 = vsel %vm1102, %v951, 0
        %1185 = vmatprep.subr.mxu0 0.0
        %1186 = vmatpush1.xpose.msra.mxu0 %v1183
        %1187 = vmatprep.subr.mxu0 0.0
        %1188 = vmatpush1.xpose.msra.mxu0 0.0
        %1189 = vmatprep.subr.mxu0 0.0
        %1190 = vmatpush1.xpose.msra.mxu0 0.0
        %1191 = vmatprep.subr.mxu0 0.0
        %1192 = vmatpush1.xpose.msra.mxu0 0.0
        %1193 = vmatprep.subr.mxu0 0.0
        %1194 = vmatpush1.xpose.msra.mxu0 0.0
        %1195 = vmatprep.subr.mxu0 0.0
        %1196 = vmatpush1.xpose.msra.mxu0 0.0
        %1197 = vmatprep.subr.mxu0 0.0
        %1198 = vmatpush1.xpose.msra.mxu0 0.0
        %1199 = vmatprep.subr.mxu0 0.0
        %1200 = vmatpush1.xpose.msra.mxu0 0.0
        %1201 = vmatprep.subr.mxu0 0.0
        %1202 = vmatpush1.xpose.msra.mxu0 0.0
        %1203 = vmatprep.subr.mxu0 0.0
        %1204 = vmatpush1.xpose.msra.mxu0 0.0
        %1205 = vmatprep.subr.mxu0 0.0
        %1206 = vmatpush1.xpose.msra.mxu0 0.0
        %1207 = vmatprep.subr.mxu0 0.0
        %1208 = vmatpush1.xpose.msra.mxu0 0.0
        %1209 = vmatprep.subr.mxu0 0.0
        %1210 = vmatpush1.xpose.msra.mxu0 0.0
        %1211 = vmatprep.subr.mxu0 0.0
        %1212 = vmatpush1.xpose.msra.mxu0 0.0
        %1213 = vmatprep.subr.mxu0 0.0
        %1214 = vmatpush1.xpose.msra.mxu0 0.0
        %1215 = vmatprep.subr.mxu0 0.0
        %1216 = vmatpush1.xpose.msra.mxu0 0.0
        %1217 = vmatprep.subr.mxu0 0.0
        %1218 = vmatpush1.xpose.msra.mxu0 0.0
        %1219 = vmatprep.subr.mxu0 0.0
        %1220 = vmatpush1.xpose.msra.mxu0 0.0
        %1221 = vmatprep.subr.mxu0 0.0
        %1222 = vmatpush1.xpose.msra.mxu0 0.0
        %1223 = vmatprep.subr.mxu0 0.0
        %1224 = vmatpush1.xpose.msra.mxu0 0.0
        %1225 = vmatprep.subr.mxu0 0.0
        %1226 = vmatpush1.xpose.msra.mxu0 0.0
        %1227 = vmatprep.subr.mxu0 0.0
        %1228 = vmatpush1.xpose.msra.mxu0 0.0
        %1229 = vmatprep.subr.mxu0 0.0
        %1230 = vmatpush1.xpose.msra.mxu0 0.0
        %1231 = vmatprep.subr.mxu0 0.0
        %1232 = vmatpush1.xpose.msra.mxu0 0.0
        %1233 = vmatprep.subr.mxu0 0.0
        %1234 = vmatpush1.xpose.msra.mxu0 0.0
        %1235 = vmatprep.subr.mxu0 0.0
        %1236 = vmatpush1.xpose.msra.mxu0 0.0
        %1237 = vmatprep.subr.mxu0 0.0
        %1238 = vmatpush1.xpose.msra.mxu0 0.0
        %1239 = vmatprep.subr.mxu0 0.0
        %1240 = vmatpush1.xpose.msra.mxu0 0.0
        %1241 = vmatprep.subr.mxu0 0.0
        %1242 = vmatpush1.xpose.msra.mxu0 0.0
        %1243 = vmatprep.subr.mxu0 0.0
        %1244 = vmatpush1.xpose.msra.mxu0 0.0
        %1245 = vmatprep.subr.mxu0 0.0
        %1246 = vmatpush1.xpose.msra.mxu0 0.0
        %1247 = vmatprep.subr.mxu0 0.0
        %1248 = vmatpush1.xpose.msra.mxu0 0.0
        %1249 = vmatprep.mubr.f32.mxu0 0.0
        %1250 = vmatmul.mubr.f32.gmra.mrb[0].mxu0 %v1180
        %v1251 = vpop.f32.mrb[0].mxu0
        %v1252 = vadd.f32 0.0, %v1251
        %v1253 = vpop.f32.mrb[0].mxu0
        %1254 = vdwg.mxu0
        %v1256 = vsel %vm1102, %v806, 0
        %v1259 = vsel %vm1102, %v952, 0
        %1261 = vmatprep.subr.mxu0 0.0
        %1262 = vmatpush1.xpose.msra.mxu0 %v1259
        %1263 = vmatprep.subr.mxu0 0.0
        %1264 = vmatpush1.xpose.msra.mxu0 0.0
        %1265 = vmatprep.subr.mxu0 0.0
        %1266 = vmatpush1.xpose.msra.mxu0 0.0
        %1267 = vmatprep.subr.mxu0 0.0
        %1268 = vmatpush1.xpose.msra.mxu0 0.0
        %1269 = vmatprep.subr.mxu0 0.0
        %1270 = vmatpush1.xpose.msra.mxu0 0.0
        %1271 = vmatprep.subr.mxu0 0.0
        %1272 = vmatpush1.xpose.msra.mxu0 0.0
        %1273 = vmatprep.subr.mxu0 0.0
        %1274 = vmatpush1.xpose.msra.mxu0 0.0
        %1275 = vmatprep.subr.mxu0 0.0
        %1276 = vmatpush1.xpose.msra.mxu0 0.0
        %1277 = vmatprep.subr.mxu0 0.0
        %1278 = vmatpush1.xpose.msra.mxu0 0.0
        %1279 = vmatprep.subr.mxu0 0.0
        %1280 = vmatpush1.xpose.msra.mxu0 0.0
        %1281 = vmatprep.subr.mxu0 0.0
        %1282 = vmatpush1.xpose.msra.mxu0 0.0
        %1283 = vmatprep.subr.mxu0 0.0
        %1284 = vmatpush1.xpose.msra.mxu0 0.0
        %1285 = vmatprep.subr.mxu0 0.0
        %1286 = vmatpush1.xpose.msra.mxu0 0.0
        %1287 = vmatprep.subr.mxu0 0.0
        %1288 = vmatpush1.xpose.msra.mxu0 0.0
        %1289 = vmatprep.subr.mxu0 0.0
        %1290 = vmatpush1.xpose.msra.mxu0 0.0
        %1291 = vmatprep.subr.mxu0 0.0
        %1292 = vmatpush1.xpose.msra.mxu0 0.0
        %1293 = vmatprep.subr.mxu0 0.0
        %1294 = vmatpush1.xpose.msra.mxu0 0.0
        %1295 = vmatprep.subr.mxu0 0.0
        %1296 = vmatpush1.xpose.msra.mxu0 0.0
        %1297 = vmatprep.subr.mxu0 0.0
        %1298 = vmatpush1.xpose.msra.mxu0 0.0
        %1299 = vmatprep.subr.mxu0 0.0
        %1300 = vmatpush1.xpose.msra.mxu0 0.0
        %1301 = vmatprep.subr.mxu0 0.0
        %1302 = vmatpush1.xpose.msra.mxu0 0.0
        %1303 = vmatprep.subr.mxu0 0.0
        %1304 = vmatpush1.xpose.msra.mxu0 0.0
        %1305 = vmatprep.subr.mxu0 0.0
        %1306 = vmatpush1.xpose.msra.mxu0 0.0
        %1307 = vmatprep.subr.mxu0 0.0
        %1308 = vmatpush1.xpose.msra.mxu0 0.0
        %1309 = vmatprep.subr.mxu0 0.0
        %1310 = vmatpush1.xpose.msra.mxu0 0.0
        %1311 = vmatprep.subr.mxu0 0.0
        %1312 = vmatpush1.xpose.msra.mxu0 0.0
        %1313 = vmatprep.subr.mxu0 0.0
        %1314 = vmatpush1.xpose.msra.mxu0 0.0
        %1315 = vmatprep.subr.mxu0 0.0
        %1316 = vmatpush1.xpose.msra.mxu0 0.0
        %1317 = vmatprep.subr.mxu0 0.0
        %1318 = vmatpush1.xpose.msra.mxu0 0.0
        %1319 = vmatprep.subr.mxu0 0.0
        %1320 = vmatpush1.xpose.msra.mxu0 0.0
        %1321 = vmatprep.subr.mxu0 0.0
        %1322 = vmatpush1.xpose.msra.mxu0 0.0
        %1323 = vmatprep.subr.mxu0 0.0
        %1324 = vmatpush1.xpose.msra.mxu0 0.0
        %1325 = vmatprep.mubr.f32.mxu0 0.0
        %1326 = vmatmul.mubr.f32.gmra.mrb[0].mxu0 %v1256
        %v1327 = vpop.f32.mrb[0].mxu0
        %v1328 = vadd.f32 0.0, %v1327
        %v1329 = vpop.f32.mrb[0].mxu0
        %1330 = vdwg.mxu0
        %v1332 = vsel %vm1102, %v807, 0
        %v1335 = vsel %vm1102, %v953, 0
        %1337 = vmatprep.subr.mxu0 0.0
        %1338 = vmatpush1.xpose.msra.mxu0 %v1335
        %1339 = vmatprep.subr.mxu0 0.0
        %1340 = vmatpush1.xpose.msra.mxu0 0.0
        %1341 = vmatprep.subr.mxu0 0.0
        %1342 = vmatpush1.xpose.msra.mxu0 0.0
        %1343 = vmatprep.subr.mxu0 0.0
        %1344 = vmatpush1.xpose.msra.mxu0 0.0
        %1345 = vmatprep.subr.mxu0 0.0
        %1346 = vmatpush1.xpose.msra.mxu0 0.0
        %1347 = vmatprep.subr.mxu0 0.0
        %1348 = vmatpush1.xpose.msra.mxu0 0.0
        %1349 = vmatprep.subr.mxu0 0.0
        %1350 = vmatpush1.xpose.msra.mxu0 0.0
        %1351 = vmatprep.subr.mxu0 0.0
        %1352 = vmatpush1.xpose.msra.mxu0 0.0
        %1353 = vmatprep.subr.mxu0 0.0
        %1354 = vmatpush1.xpose.msra.mxu0 0.0
        %1355 = vmatprep.subr.mxu0 0.0
        %1356 = vmatpush1.xpose.msra.mxu0 0.0
        %1357 = vmatprep.subr.mxu0 0.0
        %1358 = vmatpush1.xpose.msra.mxu0 0.0
        %1359 = vmatprep.subr.mxu0 0.0
        %1360 = vmatpush1.xpose.msra.mxu0 0.0
        %1361 = vmatprep.subr.mxu0 0.0
        %1362 = vmatpush1.xpose.msra.mxu0 0.0
        %1363 = vmatprep.subr.mxu0 0.0
        %1364 = vmatpush1.xpose.msra.mxu0 0.0
        %1365 = vmatprep.subr.mxu0 0.0
        %1366 = vmatpush1.xpose.msra.mxu0 0.0
        %1367 = vmatprep.subr.mxu0 0.0
        %1368 = vmatpush1.xpose.msra.mxu0 0.0
        %1369 = vmatprep.subr.mxu0 0.0
        %1370 = vmatpush1.xpose.msra.mxu0 0.0
        %1371 = vmatprep.subr.mxu0 0.0
        %1372 = vmatpush1.xpose.msra.mxu0 0.0
        %1373 = vmatprep.subr.mxu0 0.0
        %1374 = vmatpush1.xpose.msra.mxu0 0.0
        %1375 = vmatprep.subr.mxu0 0.0
        %1376 = vmatpush1.xpose.msra.mxu0 0.0
        %1377 = vmatprep.subr.mxu0 0.0
        %1378 = vmatpush1.xpose.msra.mxu0 0.0
        %1379 = vmatprep.subr.mxu0 0.0
        %1380 = vmatpush1.xpose.msra.mxu0 0.0
        %1381 = vmatprep.subr.mxu0 0.0
        %1382 = vmatpush1.xpose.msra.mxu0 0.0
        %1383 = vmatprep.subr.mxu0 0.0
        %1384 = vmatpush1.xpose.msra.mxu0 0.0
        %1385 = vmatprep.subr.mxu0 0.0
        %1386 = vmatpush1.xpose.msra.mxu0 0.0
        %1387 = vmatprep.subr.mxu0 0.0
        %1388 = vmatpush1.xpose.msra.mxu0 0.0
        %1389 = vmatprep.subr.mxu0 0.0
        %1390 = vmatpush1.xpose.msra.mxu0 0.0
        %1391 = vmatprep.subr.mxu0 0.0
        %1392 = vmatpush1.xpose.msra.mxu0 0.0
        %1393 = vmatprep.subr.mxu0 0.0
        %1394 = vmatpush1.xpose.msra.mxu0 0.0
        %1395 = vmatprep.subr.mxu0 0.0
        %1396 = vmatpush1.xpose.msra.mxu0 0.0
        %1397 = vmatprep.subr.mxu0 0.0
        %1398 = vmatpush1.xpose.msra.mxu0 0.0
        %1399 = vmatprep.subr.mxu0 0.0
        %1400 = vmatpush1.xpose.msra.mxu0 0.0
        %1401 = vmatprep.mubr.f32.mxu0 0.0
        %1402 = vmatmul.mubr.f32.gmra.mrb[0].mxu0 %v1332
        %v1403 = vpop.f32.mrb[0].mxu0
        %v1404 = vadd.f32 0.0, %v1403
        %v1405 = vpop.f32.mrb[0].mxu0
        %1406 = vdwg.mxu0
        %v1407 = vld [vmem:[%s401] sm:$0xff]
        %vm1408 = vcmp.eq.f32.partialorder %v1407, 0.0
        %v1409 = vsel %vm1408, 1, 0
        %vm1410 = vcmp.eq.s32.totalorder %v1409, 1
        %v1411 = vsel %vm1410, -1e+09, %v1176
        %v1412 = vsel %vm1410, -1e+09, %v1252
        %v1413 = vsel %vm1410, -1e+09, %v1328
        %v1414 = vsel %vm1410, -1e+09, %v1404
        %v1415 = vsel %vm1102, %v1411, -inf
        %1416 = vmax.xlane.f32.xlu0 %v1415
        %v1417 = vpop.xlane.xlu0 %1416
        %v1418 = vsel %vm1102, %v1412, -inf
        %1419 = vmax.xlane.f32.xlu0 %v1418
        %v1420 = vpop.xlane.xlu0 %1419
        %v1421 = vsel %vm1102, %v1413, -inf
        %1422 = vmax.xlane.f32.xlu0 %v1421
        %v1423 = vpop.xlane.xlu0 %1422
        %v1424 = vsel %vm1102, %v1414, -inf
        %1425 = vmax.xlane.f32.xlu0 %v1424
        %v1426 = vpop.xlane.xlu0 %1425
        %v1427 = vsub.f32 %v1411, %v1417
        %v1428 = vsub.f32 %v1412, %v1420
        %v1429 = vsub.f32 %v1413, %v1423
        %v1430 = vsub.f32 %v1414, %v1426
        %v1431 = vmul.f32 %v1427, 1.442695
        %v1432 = vpow.pop %v1431
        %v1433 = vmul.f32 %v1428, 1.442695
        %v1434 = vpow.pop %v1433
        %v1435 = vmul.f32 %v1429, 1.442695
        %v1436 = vpow.pop %v1435
        %v1437 = vmul.f32 %v1430, 1.442695
        %v1438 = vpow.pop %v1437
        %v1439 = vsel %vm1102, %v1432, 0.0
        %1440 = vadd.xlane.f32.xlu0 %v1439
        %v1441 = vpop.xlane.xlu0 %1440
        %v1442 = vsel %vm1102, %v1434, 0.0
        %1443 = vadd.xlane.f32.xlu0 %v1442
        %v1444 = vpop.xlane.xlu0 %1443
        %v1445 = vsel %vm1102, %v1436, 0.0
        %1446 = vadd.xlane.f32.xlu0 %v1445
        %v1447 = vpop.xlane.xlu0 %1446
        %v1448 = vsel %vm1102, %v1438, 0.0
        %1449 = vadd.xlane.f32.xlu0 %v1448
        %v1450 = vpop.xlane.xlu0 %1449
        %v1451 = vrcp.pop %v1441
        %v1452 = vrcp.pop %v1444
        %v1453 = vrcp.pop %v1447
        %v1454 = vrcp.pop %v1450
        %v1455 = vmul.f32 %v1432, %v1451
        %v1456 = vmul.f32 %v1434, %v1452
        %v1457 = vmul.f32 %v1436, %v1453
        %v1458 = vmul.f32 %v1438, %v1454
        %v1460 = vsel %vm1102, %v1455, 0
        %1462 = vmatprep.subr.mxu0 0.0
        %1463 = vmatpush1.msra.mxu0 %v1098
        %1464 = vmatprep.subr.mxu0 0.0
        %1465 = vmatpush1.msra.mxu0 0.0
        %1466 = vmatprep.subr.mxu0 0.0
        %1467 = vmatpush1.msra.mxu0 0.0
        %1468 = vmatprep.subr.mxu0 0.0
        %1469 = vmatpush1.msra.mxu0 0.0
        %1470 = vmatprep.subr.mxu0 0.0
        %1471 = vmatpush1.msra.mxu0 0.0
        %1472 = vmatprep.subr.mxu0 0.0
        %1473 = vmatpush1.msra.mxu0 0.0
        %1474 = vmatprep.subr.mxu0 0.0
        %1475 = vmatpush1.msra.mxu0 0.0
        %1476 = vmatprep.subr.mxu0 0.0
        %1477 = vmatpush1.msra.mxu0 0.0
        %1478 = vmatprep.subr.mxu0 0.0
        %1479 = vmatpush1.msra.mxu0 0.0
        %1480 = vmatprep.subr.mxu0 0.0
        %1481 = vmatpush1.msra.mxu0 0.0
        %1482 = vmatprep.subr.mxu0 0.0
        %1483 = vmatpush1.msra.mxu0 0.0
        %1484 = vmatprep.subr.mxu0 0.0
        %1485 = vmatpush1.msra.mxu0 0.0
        %1486 = vmatprep.subr.mxu0 0.0
        %1487 = vmatpush1.msra.mxu0 0.0
        %1488 = vmatprep.subr.mxu0 0.0
        %1489 = vmatpush1.msra.mxu0 0.0
        %1490 = vmatprep.subr.mxu0 0.0
        %1491 = vmatpush1.msra.mxu0 0.0
        %1492 = vmatprep.subr.mxu0 0.0
        %1493 = vmatpush1.msra.mxu0 0.0
        %1494 = vmatprep.subr.mxu0 0.0
        %1495 = vmatpush1.msra.mxu0 0.0
        %1496 = vmatprep.subr.mxu0 0.0
        %1497 = vmatpush1.msra.mxu0 0.0
        %1498 = vmatprep.subr.mxu0 0.0
        %1499 = vmatpush1.msra.mxu0 0.0
        %1500 = vmatprep.subr.mxu0 0.0
        %1501 = vmatpush1.msra.mxu0 0.0
        %1502 = vmatprep.subr.mxu0 0.0
        %1503 = vmatpush1.msra.mxu0 0.0
        %1504 = vmatprep.subr.mxu0 0.0
        %1505 = vmatpush1.msra.mxu0 0.0
        %1506 = vmatprep.subr.mxu0 0.0
        %1507 = vmatpush1.msra.mxu0 0.0
        %1508 = vmatprep.subr.mxu0 0.0
        %1509 = vmatpush1.msra.mxu0 0.0
        %1510 = vmatprep.subr.mxu0 0.0
        %1511 = vmatpush1.msra.mxu0 0.0
        %1512 = vmatprep.subr.mxu0 0.0
        %1513 = vmatpush1.msra.mxu0 0.0
        %1514 = vmatprep.subr.mxu0 0.0
        %1515 = vmatpush1.msra.mxu0 0.0
        %1516 = vmatprep.subr.mxu0 0.0
        %1517 = vmatpush1.msra.mxu0 0.0
        %1518 = vmatprep.subr.mxu0 0.0
        %1519 = vmatpush1.msra.mxu0 0.0
        %1520 = vmatprep.subr.mxu0 0.0
        %1521 = vmatpush1.msra.mxu0 0.0
        %1522 = vmatprep.subr.mxu0 0.0
        %1523 = vmatpush1.msra.mxu0 0.0
        %1524 = vmatprep.subr.mxu0 0.0
        %1525 = vmatpush1.msra.mxu0 0.0
        %1526 = vmatprep.mubr.f32.mxu0 0.0
        %1527 = vmatmul.mubr.f32.gmra.mrb[0].mxu0 %v1460
        %v1528 = vpop.f32.mrb[0].mxu0
        %v1529 = vadd.f32 0.0, %v1528
        %v1530 = vpop.f32.mrb[0].mxu0
        %1531 = vdwg.mxu0
        %v1533 = vsel %vm1102, %v1456, 0
        %1535 = vmatprep.subr.mxu0 0.0
        %1536 = vmatpush1.msra.mxu0 %v1099
        %1537 = vmatprep.subr.mxu0 0.0
        %1538 = vmatpush1.msra.mxu0 0.0
        %1539 = vmatprep.subr.mxu0 0.0
        %1540 = vmatpush1.msra.mxu0 0.0
        %1541 = vmatprep.subr.mxu0 0.0
        %1542 = vmatpush1.msra.mxu0 0.0
        %1543 = vmatprep.subr.mxu0 0.0
        %1544 = vmatpush1.msra.mxu0 0.0
        %1545 = vmatprep.subr.mxu0 0.0
        %1546 = vmatpush1.msra.mxu0 0.0
        %1547 = vmatprep.subr.mxu0 0.0
        %1548 = vmatpush1.msra.mxu0 0.0
        %1549 = vmatprep.subr.mxu0 0.0
        %1550 = vmatpush1.msra.mxu0 0.0
        %1551 = vmatprep.subr.mxu0 0.0
        %1552 = vmatpush1.msra.mxu0 0.0
        %1553 = vmatprep.subr.mxu0 0.0
        %1554 = vmatpush1.msra.mxu0 0.0
        %1555 = vmatprep.subr.mxu0 0.0
        %1556 = vmatpush1.msra.mxu0 0.0
        %1557 = vmatprep.subr.mxu0 0.0
        %1558 = vmatpush1.msra.mxu0 0.0
        %1559 = vmatprep.subr.mxu0 0.0
        %1560 = vmatpush1.msra.mxu0 0.0
        %1561 = vmatprep.subr.mxu0 0.0
        %1562 = vmatpush1.msra.mxu0 0.0
        %1563 = vmatprep.subr.mxu0 0.0
        %1564 = vmatpush1.msra.mxu0 0.0
        %1565 = vmatprep.subr.mxu0 0.0
        %1566 = vmatpush1.msra.mxu0 0.0
        %1567 = vmatprep.subr.mxu0 0.0
        %1568 = vmatpush1.msra.mxu0 0.0
        %1569 = vmatprep.subr.mxu0 0.0
        %1570 = vmatpush1.msra.mxu0 0.0
        %1571 = vmatprep.subr.mxu0 0.0
        %1572 = vmatpush1.msra.mxu0 0.0
        %1573 = vmatprep.subr.mxu0 0.0
        %1574 = vmatpush1.msra.mxu0 0.0
        %1575 = vmatprep.subr.mxu0 0.0
        %1576 = vmatpush1.msra.mxu0 0.0
        %1577 = vmatprep.subr.mxu0 0.0
        %1578 = vmatpush1.msra.mxu0 0.0
        %1579 = vmatprep.subr.mxu0 0.0
        %1580 = vmatpush1.msra.mxu0 0.0
        %1581 = vmatprep.subr.mxu0 0.0
        %1582 = vmatpush1.msra.mxu0 0.0
        %1583 = vmatprep.subr.mxu0 0.0
        %1584 = vmatpush1.msra.mxu0 0.0
        %1585 = vmatprep.subr.mxu0 0.0
        %1586 = vmatpush1.msra.mxu0 0.0
        %1587 = vmatprep.subr.mxu0 0.0
        %1588 = vmatpush1.msra.mxu0 0.0
        %1589 = vmatprep.subr.mxu0 0.0
        %1590 = vmatpush1.msra.mxu0 0.0
        %1591 = vmatprep.subr.mxu0 0.0
        %1592 = vmatpush1.msra.mxu0 0.0
        %1593 = vmatprep.subr.mxu0 0.0
        %1594 = vmatpush1.msra.mxu0 0.0
        %1595 = vmatprep.subr.mxu0 0.0
        %1596 = vmatpush1.msra.mxu0 0.0
        %1597 = vmatprep.subr.mxu0 0.0
        %1598 = vmatpush1.msra.mxu0 0.0
        %1599 = vmatprep.mubr.f32.mxu0 0.0
        %1600 = vmatmul.mubr.f32.gmra.mrb[0].mxu0 %v1533
        %v1601 = vpop.f32.mrb[0].mxu0
        %v1602 = vadd.f32 0.0, %v1601
        %v1603 = vpop.f32.mrb[0].mxu0
        %1604 = vdwg.mxu0
        %v1606 = vsel %vm1102, %v1457, 0
        %1608 = vmatprep.subr.mxu0 0.0
        %1609 = vmatpush1.msra.mxu0 %v1100
        %1610 = vmatprep.subr.mxu0 0.0
        %1611 = vmatpush1.msra.mxu0 0.0
        %1612 = vmatprep.subr.mxu0 0.0
        %1613 = vmatpush1.msra.mxu0 0.0
        %1614 = vmatprep.subr.mxu0 0.0
        %1615 = vmatpush1.msra.mxu0 0.0
        %1616 = vmatprep.subr.mxu0 0.0
        %1617 = vmatpush1.msra.mxu0 0.0
        %1618 = vmatprep.subr.mxu0 0.0
        %1619 = vmatpush1.msra.mxu0 0.0
        %1620 = vmatprep.subr.mxu0 0.0
        %1621 = vmatpush1.msra.mxu0 0.0
        %1622 = vmatprep.subr.mxu0 0.0
        %1623 = vmatpush1.msra.mxu0 0.0
        %1624 = vmatprep.subr.mxu0 0.0
        %1625 = vmatpush1.msra.mxu0 0.0
        %1626 = vmatprep.subr.mxu0 0.0
        %1627 = vmatpush1.msra.mxu0 0.0
        %1628 = vmatprep.subr.mxu0 0.0
        %1629 = vmatpush1.msra.mxu0 0.0
        %1630 = vmatprep.subr.mxu0 0.0
        %1631 = vmatpush1.msra.mxu0 0.0
        %1632 = vmatprep.subr.mxu0 0.0
        %1633 = vmatpush1.msra.mxu0 0.0
        %1634 = vmatprep.subr.mxu0 0.0
        %1635 = vmatpush1.msra.mxu0 0.0
        %1636 = vmatprep.subr.mxu0 0.0
        %1637 = vmatpush1.msra.mxu0 0.0
        %1638 = vmatprep.subr.mxu0 0.0
        %1639 = vmatpush1.msra.mxu0 0.0
        %1640 = vmatprep.subr.mxu0 0.0
        %1641 = vmatpush1.msra.mxu0 0.0
        %1642 = vmatprep.subr.mxu0 0.0
        %1643 = vmatpush1.msra.mxu0 0.0
        %1644 = vmatprep.subr.mxu0 0.0
        %1645 = vmatpush1.msra.mxu0 0.0
        %1646 = vmatprep.subr.mxu0 0.0
        %1647 = vmatpush1.msra.mxu0 0.0
        %1648 = vmatprep.subr.mxu0 0.0
        %1649 = vmatpush1.msra.mxu0 0.0
        %1650 = vmatprep.subr.mxu0 0.0
        %1651 = vmatpush1.msra.mxu0 0.0
        %1652 = vmatprep.subr.mxu0 0.0
        %1653 = vmatpush1.msra.mxu0 0.0
        %1654 = vmatprep.subr.mxu0 0.0
        %1655 = vmatpush1.msra.mxu0 0.0
        %1656 = vmatprep.subr.mxu0 0.0
        %1657 = vmatpush1.msra.mxu0 0.0
        %1658 = vmatprep.subr.mxu0 0.0
        %1659 = vmatpush1.msra.mxu0 0.0
        %1660 = vmatprep.subr.mxu0 0.0
        %1661 = vmatpush1.msra.mxu0 0.0
        %1662 = vmatprep.subr.mxu0 0.0
        %1663 = vmatpush1.msra.mxu0 0.0
        %1664 = vmatprep.subr.mxu0 0.0
        %1665 = vmatpush1.msra.mxu0 0.0
        %1666 = vmatprep.subr.mxu0 0.0
        %1667 = vmatpush1.msra.mxu0 0.0
        %1668 = vmatprep.subr.mxu0 0.0
        %1669 = vmatpush1.msra.mxu0 0.0
        %1670 = vmatprep.subr.mxu0 0.0
        %1671 = vmatpush1.msra.mxu0 0.0
        %1672 = vmatprep.mubr.f32.mxu0 0.0
        %1673 = vmatmul.mubr.f32.gmra.mrb[0].mxu0 %v1606
        %v1674 = vpop.f32.mrb[0].mxu0
        %v1675 = vadd.f32 0.0, %v1674
        %v1676 = vpop.f32.mrb[0].mxu0
        %1677 = vdwg.mxu0
        %v1679 = vsel %vm1102, %v1458, 0
        %1681 = vmatprep.subr.mxu0 0.0
        %1682 = vmatpush1.msra.mxu0 %v1101
        %1683 = vmatprep.subr.mxu0 0.0
        %1684 = vmatpush1.msra.mxu0 0.0
        %1685 = vmatprep.subr.mxu0 0.0
        %1686 = vmatpush1.msra.mxu0 0.0
        %1687 = vmatprep.subr.mxu0 0.0
        %1688 = vmatpush1.msra.mxu0 0.0
        %1689 = vmatprep.subr.mxu0 0.0
        %1690 = vmatpush1.msra.mxu0 0.0
        %1691 = vmatprep.subr.mxu0 0.0
        %1692 = vmatpush1.msra.mxu0 0.0
        %1693 = vmatprep.subr.mxu0 0.0
        %1694 = vmatpush1.msra.mxu0 0.0
        %1695 = vmatprep.subr.mxu0 0.0
        %1696 = vmatpush1.msra.mxu0 0.0
        %1697 = vmatprep.subr.mxu0 0.0
        %1698 = vmatpush1.msra.mxu0 0.0
        %1699 = vmatprep.subr.mxu0 0.0
        %1700 = vmatpush1.msra.mxu0 0.0
        %1701 = vmatprep.subr.mxu0 0.0
        %1702 = vmatpush1.msra.mxu0 0.0
        %1703 = vmatprep.subr.mxu0 0.0
        %1704 = vmatpush1.msra.mxu0 0.0
        %1705 = vmatprep.subr.mxu0 0.0
        %1706 = vmatpush1.msra.mxu0 0.0
        %1707 = vmatprep.subr.mxu0 0.0
        %1708 = vmatpush1.msra.mxu0 0.0
        %1709 = vmatprep.subr.mxu0 0.0
        %1710 = vmatpush1.msra.mxu0 0.0
        %1711 = vmatprep.subr.mxu0 0.0
        %1712 = vmatpush1.msra.mxu0 0.0
        %1713 = vmatprep.subr.mxu0 0.0
        %1714 = vmatpush1.msra.mxu0 0.0
        %1715 = vmatprep.subr.mxu0 0.0
        %1716 = vmatpush1.msra.mxu0 0.0
        %1717 = vmatprep.subr.mxu0 0.0
        %1718 = vmatpush1.msra.mxu0 0.0
        %1719 = vmatprep.subr.mxu0 0.0
        %1720 = vmatpush1.msra.mxu0 0.0
        %1721 = vmatprep.subr.mxu0 0.0
        %1722 = vmatpush1.msra.mxu0 0.0
        %1723 = vmatprep.subr.mxu0 0.0
        %1724 = vmatpush1.msra.mxu0 0.0
        %1725 = vmatprep.subr.mxu0 0.0
        %1726 = vmatpush1.msra.mxu0 0.0
        %1727 = vmatprep.subr.mxu0 0.0
        %1728 = vmatpush1.msra.mxu0 0.0
        %1729 = vmatprep.subr.mxu0 0.0
        %1730 = vmatpush1.msra.mxu0 0.0
        %1731 = vmatprep.subr.mxu0 0.0
        %1732 = vmatpush1.msra.mxu0 0.0
        %1733 = vmatprep.subr.mxu0 0.0
        %1734 = vmatpush1.msra.mxu0 0.0
        %1735 = vmatprep.subr.mxu0 0.0
        %1736 = vmatpush1.msra.mxu0 0.0
        %1737 = vmatprep.subr.mxu0 0.0
        %1738 = vmatpush1.msra.mxu0 0.0
        %1739 = vmatprep.subr.mxu0 0.0
        %1740 = vmatpush1.msra.mxu0 0.0
        %1741 = vmatprep.subr.mxu0 0.0
        %1742 = vmatpush1.msra.mxu0 0.0
        %1743 = vmatprep.subr.mxu0 0.0
        %1744 = vmatpush1.msra.mxu0 0.0
        %1745 = vmatprep.mubr.f32.mxu0 0.0
        %1746 = vmatmul.mubr.f32.gmra.mrb[0].mxu0 %v1679
        %v1747 = vpop.f32.mrb[0].mxu0
        %v1748 = vadd.f32 0.0, %v1747
        %v1749 = vpop.f32.mrb[0].mxu0
        %1750 = vdwg.mxu0
        %v1751 = vcombine.low %v1529, %v1675
        %v1752 = vcombine.high %v1529, %v1675
        %v1754 = vunpack.c.l.s4 1983009808
        %v1755 = vunpack.c.0.s8 %v1754
        %v1756 = vlaneseq
        %v1757 = vshrl.u32 %v1756, 7
        %v1758 = vsub.s32 %v1755, %v1757
        %v1759 = vrot.slane %v1751, %v1758
        %v1761 = vunpack.c.l.s4 1983009808
        %v1762 = vunpack.c.0.s8 %v1761
        %v1763 = vlaneseq
        %v1764 = vshrl.u32 %v1763, 7
        %v1765 = vsub.s32 %v1762, %v1764
        %v1766 = vrot.slane %v1752, %v1765
        %v1767 = vcombine.low %v1602, %v1748
        %v1768 = vcombine.high %v1602, %v1748
        %v1770 = vunpack.c.l.s4 1983009808
        %v1771 = vunpack.c.0.s8 %v1770
        %v1772 = vlaneseq
        %v1773 = vshrl.u32 %v1772, 7
        %v1774 = vsub.s32 %v1771, %v1773
        %v1775 = vrot.slane %v1767, %v1774
        %v1777 = vunpack.c.l.s4 1983009808
        %v1778 = vunpack.c.0.s8 %v1777
        %v1779 = vlaneseq
        %v1780 = vshrl.u32 %v1779, 7
        %v1781 = vsub.s32 %v1778, %v1780
        %v1782 = vrot.slane %v1768, %v1781
        %v1783 = vcombine.low %v1759, %v1775
        %v1784 = vcombine.high %v1759, %v1775
        %v1786 = vunpack.c.l.s4 1934713408
        %v1787 = vunpack.c.0.s8 %v1786
        %v1788 = vlaneseq
        %v1789 = vshrl.u32 %v1788, 7
        %v1790 = vsub.s32 %v1787, %v1789
        %v1791 = vrot.slane %v1783, %v1790
        %v1793 = vunpack.c.l.s4 1934713408
        %v1794 = vunpack.c.0.s8 %v1793
        %v1795 = vlaneseq
        %v1796 = vshrl.u32 %v1795, 7
        %v1797 = vsub.s32 %v1794, %v1796
        %v1798 = vrot.slane %v1784, %v1797
        %v1799 = vcombine.low %v1766, %v1782
        %v1800 = vcombine.high %v1766, %v1782
        %v1802 = vunpack.c.l.s4 1934713408
        %v1803 = vunpack.c.0.s8 %v1802
        %v1804 = vlaneseq
        %v1805 = vshrl.u32 %v1804, 7
        %v1806 = vsub.s32 %v1803, %v1805
        %v1807 = vrot.slane %v1799, %v1806
        %v1809 = vunpack.c.l.s4 1934713408
        %v1810 = vunpack.c.0.s8 %v1809
        %v1811 = vlaneseq
        %v1812 = vshrl.u32 %v1811, 7
        %v1813 = vsub.s32 %v1810, %v1812
        %v1814 = vrot.slane %v1800, %v1813
        %v1815 = vcombine.high %v1791, 0.0
        %v1816 = vcombine.high %v1798, 0.0
        %v1817 = vcombine.high %v1807, 0.0
        %v1818 = vcombine.high %v1814, 0.0
        %v1819 = vcombine.low %v1791, %v1798
        %v1821 = vunpack.c.l.s4 1983009808
        %v1822 = vunpack.c.0.s8 %v1821
        %v1823 = vlaneseq
        %v1824 = vshrl.u32 %v1823, 7
        %v1825 = vsub.s32 %v1822, %v1824
        %v1826 = vrot.slane %v1819, %v1825
        %v1827 = vcombine.low %v1815, %v1816
        %v1829 = vunpack.c.l.s4 1983009808
        %v1830 = vunpack.c.0.s8 %v1829
        %v1831 = vlaneseq
        %v1832 = vshrl.u32 %v1831, 7
        %v1833 = vsub.s32 %v1830, %v1832
        %v1834 = vrot.slane %v1827, %v1833
        %v1835 = vcombine.low %v1807, %v1814
        %v1837 = vunpack.c.l.s4 1983009808
        %v1838 = vunpack.c.0.s8 %v1837
        %v1839 = vlaneseq
        %v1840 = vshrl.u32 %v1839, 7
        %v1841 = vsub.s32 %v1838, %v1840
        %v1842 = vrot.slane %v1835, %v1841
        %v1843 = vcombine.low %v1817, %v1818
        %v1845 = vunpack.c.l.s4 1983009808
        %v1846 = vunpack.c.0.s8 %v1845
        %v1847 = vlaneseq
        %v1848 = vshrl.u32 %v1847, 7
        %v1849 = vsub.s32 %v1846, %v1848
        %v1850 = vrot.slane %v1843, %v1849
        %v1851 = vcombine.low %v1826, %v1834
        %v1852 = vcombine.high %v1826, %v1834
        %v1854 = vunpack.c.l.s4 1934713408
        %v1855 = vunpack.c.0.s8 %v1854
        %v1856 = vlaneseq
        %v1857 = vshrl.u32 %v1856, 7
        %v1858 = vsub.s32 %v1855, %v1857
        %v1859 = vrot.slane %v1851, %v1858
        %v1861 = vunpack.c.l.s4 1934713408
        %v1862 = vunpack.c.0.s8 %v1861
        %v1863 = vlaneseq
        %v1864 = vshrl.u32 %v1863, 7
        %v1865 = vsub.s32 %v1862, %v1864
        %v1866 = vrot.slane %v1852, %v1865
        %v1867 = vcombine.low %v1842, %v1850
        %v1868 = vcombine.high %v1842, %v1850
        %v1870 = vunpack.c.l.s4 1934713408
        %v1871 = vunpack.c.0.s8 %v1870
        %v1872 = vlaneseq
        %v1873 = vshrl.u32 %v1872, 7
        %v1874 = vsub.s32 %v1871, %v1873
        %v1875 = vrot.slane %v1867, %v1874
        %v1877 = vunpack.c.l.s4 1934713408
        %v1878 = vunpack.c.0.s8 %v1877
        %v1879 = vlaneseq
        %v1880 = vshrl.u32 %v1879, 7
        %v1881 = vsub.s32 %v1878, %v1880
        %v1882 = vrot.slane %v1868, %v1881
        %v1883 = vcombine.low %v1859, %v1875
        %v1884 = vcombine.high %v1859, %v1875
        %v1885 = vcombine.low %v1866, %v1882
        %v1886 = vcombine.high %v1866, %v1882
        %1888 = vrot.lane.b32.xlu0 %v1884, 8
        %v1889 = vpop.permute.xlu0 %1888
        %1892 = vrot.lane.b32.xlu0 %v1885, 16
        %v1893 = vpop.permute.xlu0 %1892
        %1896 = vrot.lane.b32.xlu0 %v1886, 24
        %v1897 = vpop.permute.xlu0 %1896
        %v1899 = vsel %vm1102, %v1883, %v1889
        %vm1900 = vcmask 130048
        %v1901 = vsel %vm1900, %v1899, %v1893
        %vm1902 = vcmask 195584
        %v1903 = vsel %vm1902, %v1901, %v1897
        %v1904 = vld [vmem:[#allocation10] sm:$0xff]
        %v1905 = vld [vmem:[#allocation10 + $0x8] sm:$0xff]
        %v1906 = vld [vmem:[#allocation10 + $0x10] sm:$0xff]
        %v1907 = vld [vmem:[#allocation10 + $0x18] sm:$0xff]
        %v1908 = vld [vmem:[%s9] sm:$0x1]
        %v1910 = vlaneseq
        %v1911 = vshrl.u32 %v1910, 7
        %v1912 = vsub.s32 0, %v1911
        %v1913 = vrot.slane %v1908, %v1912
        %v1916 = vsel %vm456, %v1903, 0
        %1918 = vmatprep.subr.mxu0 0.0
        %1919 = vmatpush1.msra.mxu0 %v1904
        %1920 = vmatprep.subr.mxu0 0.0
        %1921 = vmatpush1.msra.mxu0 %v1905
        %1922 = vmatprep.subr.mxu0 0.0
        %1923 = vmatpush1.msra.mxu0 %v1906
        %1924 = vmatprep.subr.mxu0 0.0
        %1925 = vmatpush1.msra.mxu0 %v1907
        %1926 = vmatprep.subr.mxu0 0.0
        %1927 = vmatpush1.msra.mxu0 0.0
        %1928 = vmatprep.subr.mxu0 0.0
        %1929 = vmatpush1.msra.mxu0 0.0
        %1930 = vmatprep.subr.mxu0 0.0
        %1931 = vmatpush1.msra.mxu0 0.0
        %1932 = vmatprep.subr.mxu0 0.0
        %1933 = vmatpush1.msra.mxu0 0.0
        %1934 = vmatprep.subr.mxu0 0.0
        %1935 = vmatpush1.msra.mxu0 0.0
        %1936 = vmatprep.subr.mxu0 0.0
        %1937 = vmatpush1.msra.mxu0 0.0
        %1938 = vmatprep.subr.mxu0 0.0
        %1939 = vmatpush1.msra.mxu0 0.0
        %1940 = vmatprep.subr.mxu0 0.0
        %1941 = vmatpush1.msra.mxu0 0.0
        %1942 = vmatprep.subr.mxu0 0.0
        %1943 = vmatpush1.msra.mxu0 0.0
        %1944 = vmatprep.subr.mxu0 0.0
        %1945 = vmatpush1.msra.mxu0 0.0
        %1946 = vmatprep.subr.mxu0 0.0
        %1947 = vmatpush1.msra.mxu0 0.0
        %1948 = vmatprep.subr.mxu0 0.0
        %1949 = vmatpush1.msra.mxu0 0.0
        %1950 = vmatprep.subr.mxu0 0.0
        %1951 = vmatpush1.msra.mxu0 0.0
        %1952 = vmatprep.subr.mxu0 0.0
        %1953 = vmatpush1.msra.mxu0 0.0
        %1954 = vmatprep.subr.mxu0 0.0
        %1955 = vmatpush1.msra.mxu0 0.0
        %1956 = vmatprep.subr.mxu0 0.0
        %1957 = vmatpush1.msra.mxu0 0.0
        %1958 = vmatprep.subr.mxu0 0.0
        %1959 = vmatpush1.msra.mxu0 0.0
        %1960 = vmatprep.subr.mxu0 0.0
        %1961 = vmatpush1.msra.mxu0 0.0
        %1962 = vmatprep.subr.mxu0 0.0
        %1963 = vmatpush1.msra.mxu0 0.0
        %1964 = vmatprep.subr.mxu0 0.0
        %1965 = vmatpush1.msra.mxu0 0.0
        %1966 = vmatprep.subr.mxu0 0.0
        %1967 = vmatpush1.msra.mxu0 0.0
        %1968 = vmatprep.subr.mxu0 0.0
        %1969 = vmatpush1.msra.mxu0 0.0
        %1970 = vmatprep.subr.mxu0 0.0
        %1971 = vmatpush1.msra.mxu0 0.0
        %1972 = vmatprep.subr.mxu0 0.0
        %1973 = vmatpush1.msra.mxu0 0.0
        %1974 = vmatprep.subr.mxu0 0.0
        %1975 = vmatpush1.msra.mxu0 0.0
        %1976 = vmatprep.subr.mxu0 0.0
        %1977 = vmatpush1.msra.mxu0 0.0
        %1978 = vmatprep.subr.mxu0 0.0
        %1979 = vmatpush1.msra.mxu0 0.0
        %1980 = vmatprep.subr.mxu0 0.0
        %1981 = vmatpush1.msra.mxu0 0.0
        %1982 = vmatprep.mubr.f32.mxu0 0.0
        %1983 = vmatmul.mubr.f32.gmra.mrb[0].mxu0 %v1916
        %v1984 = vpop.f32.mrb[0].mxu0
        %v1985 = vadd.f32 %v1913, %v1984
        %v1986 = vpop.f32.mrb[0].mxu0
        %1987 = vdwg.mxu0
        %v1988 = vadd.f32 %v455, %v1985
        %1989 = vst.msk [vmem:[%s454] sm:$0xff] %vm456, %v1988
        %s1990 = sand.u32 %s259, 1
        %s1991 = scalar_lea.sflag [#allocation4], %s1990
        %s1992 = sand.u32 %s259, 1
        %s1993 = smul.addr %s1992, 8
        %s1994 = scalar_lea.vmem [#allocation11], %s1993
        // Predicated region
        $region81: #{tpu_custom_call.1} parent=59 // pred_check
          %p1995 = pneg %p269
        $region82: #{tpu_custom_call.1} parent=59 // pred_check_branch
          %1997 = sbr.rel (%p1995) target = $region84
        $region83: #{tpu_custom_call.1} parent=59 // pred_region
          %s1999 = ssub.s32 128, 128
          %2000 = vsyncadd %s1991, %s1999
          %s2001 = smul.addr %s31, 128
          %s2002 = scalar_lea.hbm %s10, %s2001
          %s2004 = sshll.u32 %s1994, 4
          %s2005 = int_to_ptr.vmem [resolvable:$true] %s2004
          %2007 = dma.vmem_to_hbm [thread:$0]  %s2005, 128, %s2002, %s1991
        $region84: #{tpu_custom_call.1} parent=59 // pred_fallthru
          _
      $region60: #{tpu_custom_call.1} parent=5 // pred_fallthru
        _
      %p2008 = scmp.le.s32.totalorder 2, %s26
      // Predicated region
      $region85: #{tpu_custom_call.1} parent=5 // pred_check
        %p2009 = pneg %p2008
      $region86: #{tpu_custom_call.1} parent=5 // pred_check_branch
        %2011 = sbr.rel (%p2009) target = $region88
      $region87: #{tpu_custom_call.1} parent=5 // pred_region
        %s2012 = ssub.s32 %s26, 2
        // Predicated region
        $region89: #{tpu_custom_call.1} parent=87 // pred_check
          %p2013 = pneg %p275
        $region90: #{tpu_custom_call.1} parent=87 // pred_check_branch
          %2015 = sbr.rel (%p2013) target = $region92
        $region91: #{tpu_custom_call.1} parent=87 // pred_region
          %s2016 = sand.u32 %s260, 1
          %s2017 = scalar_lea.sflag [#allocation4], %s2016
          %s2018 = sand.u32 %s260, 1
          %s2019 = smul.addr %s2018, 8
          %s2020 = scalar_lea.vmem [#allocation11], %s2019
          %2021 = dma.done %s2017, 128
        $region92: #{tpu_custom_call.1} parent=87 // pred_fallthru
          _
      $region88: #{tpu_custom_call.1} parent=5 // pred_fallthru
        _
    $region6: #{tpu_custom_call.1} parent=1 // loop_footer
      %s30 = sadd.s32 1, %s26
    $region7: #{tpu_custom_call.1} parent=1 // loop_footer_branch
      %25 = sbr.rel target = $region3
    $region8: #{tpu_custom_call.1} parent=1 // loop_exit
      _
    %2022 = vsyncpa [#allocation3], 1
    %s2023 = scalar_lea.sflag [#allocation3], 1
    %2024 = vsyncpa %s2023, 1
    %2025 = vsyncpa [#allocation6], 1
    %s2026 = scalar_lea.sflag [#allocation6], 1
    %2027 = vsyncpa %s2026, 1
    %2028 = vsyncpa [#allocation9], 1
    %2029 = vsyncpa [#allocation4], 1
    %s2030 = scalar_lea.sflag [#allocation4], 1
    %2031 = vsyncpa %s2030, 1

</llo_original>
